<compile_context>
chip_gen: v7x
topology: tpu7x:2x2x1
jax: 0.10.0
libtpu: 0.0.40
codegen_flags: <defaults>
</compile_context>

<pallas_src>
import math
import jax
import jax.numpy as jnp
from jax.experimental import pallas as pl
from jax.experimental.pallas import tpu as pltpu

# ---- model hyper-parameters (scaled-down but shape-consistent with TransAm) ----
S = 8            # sequence length (dataLen slice actually used)
B = 2            # batch
E = 40           # feature_size / d_model (module default 250; kept divisible by nhead=10)
NHEAD = 10       # nn.TransformerEncoderLayer(nhead=10)
HD = E // NHEAD  # head dim
F = 128          # dim_feedforward (PyTorch default 2048, scaled down)
EPS = 1e-5       # LayerNorm eps (PyTorch default)
DATALEN = 500    # PositionalEncoding buffer length


def _layer_norm(x, gamma, beta):
    mean = jnp.mean(x, axis=-1, keepdims=True)
    var = jnp.mean((x - mean) ** 2, axis=-1, keepdims=True)
    return (x - mean) * jax.lax.rsqrt(var + EPS) * gamma + beta


def transam_kernel(x_ref, pe_ref, mask_ref, hm_ref,
                   wq_ref, bq_ref, wk_ref, bk_ref, wv_ref, bv_ref,
                   wo_ref, ob_ref,
                   g1_ref, be1_ref, w1_ref, b1_ref, w2_ref, b2_ref,
                   g2_ref, be2_ref, dw_ref, db_ref,
                   o_ref):
    bb, s, e = x_ref.shape[1], x_ref.shape[2], x_ref.shape[3]
    r = bb * s

    # positional encoding (broadcast over batch), then fold batch into rows
    x = x_ref[0] + pe_ref[...][None, :, :]            # (BB, S, E) f32
    x2 = x.reshape(r, e)                              # (R, E)  f32

    # ---------------- QKV projections ----------------
    # three lane-dense 2-D MXU matmuls; weights pre-transposed, 1/sqrt(HD) folded into wq/bq
    xb = x2.astype(jnp.bfloat16)
    q = jnp.dot(xb, wq_ref[...], preferred_element_type=jnp.float32) + bq_ref[...]
    k = jnp.dot(xb, wk_ref[...], preferred_element_type=jnp.float32) + bk_ref[...]
    v = jnp.dot(xb, wv_ref[...], preferred_element_type=jnp.float32) + bv_ref[...]

    # ---------------- self-attention, all heads batched ----------------
    # head selection via a 0/1 column mask (no 4-lane slices, no transposes);
    # one batched einsum for scores, ONE softmax, one batched einsum for P@V.
    hm = hm_ref[...]                                  # (H, 1, E)
    qh = (q[None] * hm).astype(jnp.bfloat16)          # (H, R, E) - only head-h columns nonzero
    kh = jnp.broadcast_to(k.astype(jnp.bfloat16)[None], (NHEAD, r, e))
    scores = jnp.einsum('hre,hte->hrt', qh, kh,
                        preferred_element_type=jnp.float32)      # (H, R, R)
    scores = scores + mask_ref[...][None]             # block-causal additive mask (0 / -inf)
    p = jax.nn.softmax(scores, axis=-1)               # f32

    vh = (v[None] * hm).astype(jnp.bfloat16)          # (H, R, E), disjoint head columns
    ctx = jnp.einsum('hrt,hte->hre', p.astype(jnp.bfloat16), vh,
                     preferred_element_type=jnp.float32)          # (H, R, E)
    ctx = jnp.sum(ctx, axis=0)                        # (R, E) == concatenated heads

    attn = jnp.dot(ctx.astype(jnp.bfloat16), wo_ref[...],
                   preferred_element_type=jnp.float32) + ob_ref[...]

    # TODO(synk): dropout layers are identity here (inference/eval semantics).
    x1 = _layer_norm(x2 + attn, g1_ref[...], be1_ref[...])       # post-norm (PyTorch default)

    # ---------------- feed-forward ----------------
    h1 = jnp.dot(x1.astype(jnp.bfloat16), w1_ref[...],
                 preferred_element_type=jnp.float32) + b1_ref[...]
    h1 = jnp.maximum(h1, 0.0)
    h2 = jnp.dot(h1.astype(jnp.bfloat16), w2_ref[...],
                 preferred_element_type=jnp.float32) + b2_ref[...]
    x3 = _layer_norm(x1 + h2, g2_ref[...], be2_ref[...])

    # ---------------- decoder Linear(E, 1): VPU multiply + lane reduction ----------------
    dec = jnp.sum(x3.reshape(bb, s, e) * dw_ref[...], axis=-1) + db_ref[...]   # (BB, S)
    o_ref[0] = dec


def _positional_encoding_table(d_model, data_len=DATALEN):
    position = jnp.arange(data_len, dtype=jnp.float32)[:, None]
    div_term = jnp.exp(jnp.arange(0, d_model, 2, dtype=jnp.float32)
                       * (-math.log(10000.0) / d_model))
    ang = position * div_term                                  # (data_len, d_model//2)
    pe = jnp.stack([jnp.sin(ang), jnp.cos(ang)], axis=-1).reshape(data_len, d_model)
    return pe


def _block_causal_mask(bb, s):
    """(bb*s, bb*s) additive mask: causal within each batch block, -inf across blocks."""
    r = bb * s
    idx = jnp.arange(r)
    same_batch = (idx[:, None] // s) == (idx[None, :] // s)
    causal = (idx[None, :] % s) <= (idx[:, None] % s)
    return jnp.where(same_batch & causal, 0.0, -jnp.inf).astype(jnp.float32)


def _head_col_mask():
    h = jnp.arange(NHEAD)[:, None]
    e = jnp.arange(E)[None, :]
    return (e // HD == h).astype(jnp.float32)[:, None, :]       # (H, 1, E)


def _grid_split(batch):
    """v7x has 2 TensorCores/chip -> keep a parallel batch grid; v5e/v6e -> one grid step."""
    try:
        kind = jax.devices()[0].device_kind.lower()
    except Exception:
        kind = ""
    two_tc = ("v7" in kind) or ("7x" in kind)
    if two_tc and batch % 2 == 0:
        return 2, batch // 2
    return 1, batch


def init_params(key):
    ks = jax.random.split(key, 8)

    def uni(k, shape, bound):
        return jax.random.uniform(k, shape, jnp.float32, -bound, bound)

    p = {}
    p["pe"] = _positional_encoding_table(E)                     # (500, E)
    # multi-head attention (PyTorch layout: weight @ x.T convention, i.e. y = x @ W.T + b)
    p["in_proj_w"] = uni(ks[0], (3 * E, E), 1.0 / math.sqrt(E))
    p["in_proj_b"] = jnp.zeros((1, 3 * E), jnp.float32)
    p["out_proj_w"] = uni(ks[1], (E, E), 1.0 / math.sqrt(E))
    p["out_proj_b"] = jnp.zeros((1, E), jnp.float32)
    # layer norms
    p["ln1_g"] = jnp.ones((1, E), jnp.float32)
    p["ln1_b"] = jnp.zeros((1, E), jnp.float32)
    p["ln2_g"] = jnp.ones((1, E), jnp.float32)
    p["ln2_b"] = jnp.zeros((1, E), jnp.float32)
    # feed-forward
    p["w1"] = uni(ks[2], (F, E), 1.0 / math.sqrt(E))
    p["b1"] = uni(ks[3], (1, F), 1.0 / math.sqrt(E))
    p["w2"] = uni(ks[4], (E, F), 1.0 / math.sqrt(F))
    p["b2"] = uni(ks[5], (1, E), 1.0 / math.sqrt(F))
    # decoder: weight.uniform_(-0.1, 0.1), bias.zero_()  (init_weights)
    p["dec_w"] = uni(ks[6], (1, E), 0.1)
    p["dec_b"] = jnp.zeros((1, 1), jnp.float32)
    return p


def transam_forward(src, params):
    """src: (S, B, E) float32  ->  (S, B, 1) float32"""
    s_len, batch, _ = src.shape
    G, BB = _grid_split(batch)
    R = BB * s_len
    scale = 1.0 / math.sqrt(HD)
    bf16 = jnp.bfloat16

    pe = params["pe"][:s_len]                       # (S, E)
    mask = _block_causal_mask(BB, s_len)            # (R, R)
    hm = _head_col_mask()                           # (H, 1, E)

    # -- pre-transpose / split / scale weights in the wrapper (free layout plumbing) --
    ipw, ipb = params["in_proj_w"], params["in_proj_b"]
    wq = (ipw[:E, :].T * scale).astype(bf16)        # (E, E), 1/sqrt(HD) folded in
    wk = ipw[E:2 * E, :].T.astype(bf16)
    wv = ipw[2 * E:, :].T.astype(bf16)
    bq = ipb[:, :E] * scale
    bk = ipb[:, E:2 * E]
    bv = ipb[:, 2 * E:]
    wo = params["out_proj_w"].T.astype(bf16)        # (E, E)
    ob = params["out_proj_b"]
    w1 = params["w1"].T.astype(bf16)                # (E, F)
    w2 = params["w2"].T.astype(bf16)                # (F, E)
    b1, b2 = params["b1"], params["b2"]
    g1, be1 = params["ln1_g"], params["ln1_b"]
    g2, be2 = params["ln2_g"], params["ln2_b"]
    dw = params["dec_w"].reshape(1, 1, E)           # decoder row, used on the VPU
    db = params["dec_b"].reshape(1, 1)

    xg = jnp.transpose(src, (1, 0, 2)).reshape(G, BB, s_len, E)

    weights = [pe, mask, hm,
               wq, bq, wk, bk, wv, bv,
               wo, ob,
               g1, be1, w1, b1, w2, b2,
               g2, be2, dw, db]

    def full_spec(a):
        nd = a.ndim
        return pl.BlockSpec(a.shape, lambda g, _nd=nd: (0,) * _nd)

    flops = (2 * batch * s_len * E * (4 * E + 2 * F)     # qkv + out-proj + FFN
             + 4 * G * NHEAD * R * R * E                 # scores + P@V (masked full-E form)
             + 2 * batch * s_len * E)                    # decoder
    transcendentals = G * NHEAD * R * R                  # softmax exps
    bytes_accessed = int(sum(int(a.size) * a.dtype.itemsize for a in [xg] + weights)
                         + batch * s_len * 4)

    out = pl.pallas_call(
        transam_kernel,
        out_shape=jax.ShapeDtypeStruct((G, BB, s_len), jnp.float32),
        grid=(G,),
        in_specs=[pl.BlockSpec((1, BB, s_len, E), lambda g: (g, 0, 0, 0))]
                 + [full_spec(w) for w in weights],
        out_specs=pl.BlockSpec((1, BB, s_len), lambda g: (g, 0, 0)),
        compiler_params=pltpu.CompilerParams(dimension_semantics=("parallel",)),
        cost_estimate=pl.CostEstimate(flops=int(flops),
                                      transcendentals=int(transcendentals),
                                      bytes_accessed=bytes_accessed),
    )(xg, *weights)

    out = out.reshape(batch, s_len)                 # (B, S)
    return jnp.transpose(out, (1, 0))[:, :, None]   # back to (S, B, 1)


if __name__ == "__main__":
    key = jax.random.PRNGKey(0)
    k_src, k_par = jax.random.split(key)
    src = jax.random.normal(k_src, (S, B, E), jnp.float32)
    params = init_params(k_par)

    out = transam_forward(src, params)
    jax.block_until_ready(out)
    assert out.shape == (S, B, 1), out.shape
    assert bool(jnp.all(jnp.isfinite(out)))
    print("KERNEL_OK")
</pallas_src>

<mosaic_0001>
module attributes {stable_mosaic.version = 11 : i64} {
  func.func @transam_kernel(%arg0: i32, %arg1: memref<1x2x8x40xf32, #tpu.memory_space<vmem>>, %arg2: memref<8x40xf32, #tpu.memory_space<vmem>>, %arg3: memref<16x16xf32, #tpu.memory_space<vmem>>, %arg4: memref<10x1x40xf32, #tpu.memory_space<vmem>>, %arg5: memref<40x40xbf16, #tpu.memory_space<vmem>>, %arg6: memref<1x40xf32, #tpu.memory_space<vmem>>, %arg7: memref<40x40xbf16, #tpu.memory_space<vmem>>, %arg8: memref<1x40xf32, #tpu.memory_space<vmem>>, %arg9: memref<40x40xbf16, #tpu.memory_space<vmem>>, %arg10: memref<1x40xf32, #tpu.memory_space<vmem>>, %arg11: memref<40x40xbf16, #tpu.memory_space<vmem>>, %arg12: memref<1x40xf32, #tpu.memory_space<vmem>>, %arg13: memref<1x40xf32, #tpu.memory_space<vmem>>, %arg14: memref<1x40xf32, #tpu.memory_space<vmem>>, %arg15: memref<40x128xbf16, #tpu.memory_space<vmem>>, %arg16: memref<1x128xf32, #tpu.memory_space<vmem>>, %arg17: memref<128x40xbf16, #tpu.memory_space<vmem>>, %arg18: memref<1x40xf32, #tpu.memory_space<vmem>>, %arg19: memref<1x40xf32, #tpu.memory_space<vmem>>, %arg20: memref<1x40xf32, #tpu.memory_space<vmem>>, %arg21: memref<1x1x40xf32, #tpu.memory_space<vmem>>, %arg22: memref<1x1xf32, #tpu.memory_space<vmem>>, %arg23: memref<1x2x8xf32, #tpu.memory_space<vmem>>) attributes {dimension_semantics = [#tpu.dimension_semantics<parallel>], iteration_bounds = array<i64: 1>, scalar_prefetch = 0 : i64, scratch_operands = 0 : i64, tpu.core_type = #tpu.core_type<tc>, window_params = [{transform_indices = @transform_0, window_bounds = array<i64: 1, 2, 8, 40>}, {pipeline_mode = #tpu.pipeline_mode<synchronous>, transform_indices = @transform_1, window_bounds = array<i64: 8, 40>}, {pipeline_mode = #tpu.pipeline_mode<synchronous>, transform_indices = @transform_2, window_bounds = array<i64: 16, 16>}, {pipeline_mode = #tpu.pipeline_mode<synchronous>, transform_indices = @transform_3, window_bounds = array<i64: 10, 1, 40>}, {pipeline_mode = #tpu.pipeline_mode<synchronous>, transform_indices = @transform_4, window_bounds = array<i64: 40, 40>}, {pipeline_mode = #tpu.pipeline_mode<synchronous>, transform_indices = @transform_5, window_bounds = array<i64: 1, 40>}, {pipeline_mode = #tpu.pipeline_mode<synchronous>, transform_indices = @transform_6, window_bounds = array<i64: 40, 40>}, {pipeline_mode = #tpu.pipeline_mode<synchronous>, transform_indices = @transform_7, window_bounds = array<i64: 1, 40>}, {pipeline_mode = #tpu.pipeline_mode<synchronous>, transform_indices = @transform_8, window_bounds = array<i64: 40, 40>}, {pipeline_mode = #tpu.pipeline_mode<synchronous>, transform_indices = @transform_9, window_bounds = array<i64: 1, 40>}, {pipeline_mode = #tpu.pipeline_mode<synchronous>, transform_indices = @transform_10, window_bounds = array<i64: 40, 40>}, {pipeline_mode = #tpu.pipeline_mode<synchronous>, transform_indices = @transform_11, window_bounds = array<i64: 1, 40>}, {pipeline_mode = #tpu.pipeline_mode<synchronous>, transform_indices = @transform_12, window_bounds = array<i64: 1, 40>}, {pipeline_mode = #tpu.pipeline_mode<synchronous>, transform_indices = @transform_13, window_bounds = array<i64: 1, 40>}, {pipeline_mode = #tpu.pipeline_mode<synchronous>, transform_indices = @transform_14, window_bounds = array<i64: 40, 128>}, {pipeline_mode = #tpu.pipeline_mode<synchronous>, transform_indices = @transform_15, window_bounds = array<i64: 1, 128>}, {pipeline_mode = #tpu.pipeline_mode<synchronous>, transform_indices = @transform_16, window_bounds = array<i64: 128, 40>}, {pipeline_mode = #tpu.pipeline_mode<synchronous>, transform_indices = @transform_17, window_bounds = array<i64: 1, 40>}, {pipeline_mode = #tpu.pipeline_mode<synchronous>, transform_indices = @transform_18, window_bounds = array<i64: 1, 40>}, {pipeline_mode = #tpu.pipeline_mode<synchronous>, transform_indices = @transform_19, window_bounds = array<i64: 1, 40>}, {pipeline_mode = #tpu.pipeline_mode<synchronous>, transform_indices = @transform_20, window_bounds = array<i64: 1, 1, 40>}, {pipeline_mode = #tpu.pipeline_mode<synchronous>, transform_indices = @transform_21, window_bounds = array<i64: 1, 1>}, {transform_indices = @transform_22, window_bounds = array<i64: 1, 2, 8>}]} {
    %c0 = arith.constant 0 : index
    %c0_0 = arith.constant 0 : index
    %c0_1 = arith.constant 0 : index
    %c0_2 = arith.constant 0 : index
    %0 = vector.load %arg1[%c0, %c0_0, %c0_1, %c0_2] : memref<1x2x8x40xf32, #tpu.memory_space<vmem>>, vector<1x2x8x40xf32>
    %1 = vector.shape_cast %0 : vector<1x2x8x40xf32> to vector<2x8x40xf32>
    %c0_3 = arith.constant 0 : index
    %c0_4 = arith.constant 0 : index
    %2 = vector.load %arg2[%c0_3, %c0_4] : memref<8x40xf32, #tpu.memory_space<vmem>>, vector<8x40xf32>
    %3 = vector.shape_cast %2 : vector<8x40xf32> to vector<1x8x40xf32>
    %4 = vector.broadcast %3 : vector<1x8x40xf32> to vector<2x8x40xf32>
    %5 = arith.addf %1, %4 : vector<2x8x40xf32>
    %6 = vector.shape_cast %5 : vector<2x8x40xf32> to vector<16x40xf32>
    %7 = arith.truncf %6 : vector<16x40xf32> to vector<16x40xbf16>
    %c0_5 = arith.constant 0 : index
    %c0_6 = arith.constant 0 : index
    %8 = vector.load %arg5[%c0_5, %c0_6] : memref<40x40xbf16, #tpu.memory_space<vmem>>, vector<40x40xbf16>
    %cst = arith.constant dense<0.000000e+00> : vector<16x40xf32>
    %9 = tpu.matmul %7, %8, %cst {dimension_numbers = #tpu.dot_dimension_numbers<[1], [0], [0], [1], [0, 0, 1, 1], [], []>} : vector<16x40xbf16>, vector<40x40xbf16>, vector<16x40xf32> -> vector<16x40xf32>
    %c0_7 = arith.constant 0 : index
    %c0_8 = arith.constant 0 : index
    %10 = vector.load %arg6[%c0_7, %c0_8] : memref<1x40xf32, #tpu.memory_space<vmem>>, vector<1x40xf32>
    %11 = vector.broadcast %10 : vector<1x40xf32> to vector<16x40xf32>
    %12 = arith.addf %9, %11 : vector<16x40xf32>
    %c0_9 = arith.constant 0 : index
    %c0_10 = arith.constant 0 : index
    %13 = vector.load %arg7[%c0_9, %c0_10] : memref<40x40xbf16, #tpu.memory_space<vmem>>, vector<40x40xbf16>
    %cst_11 = arith.constant dense<0.000000e+00> : vector<16x40xf32>
    %14 = tpu.matmul %7, %13, %cst_11 {dimension_numbers = #tpu.dot_dimension_numbers<[1], [0], [0], [1], [0, 0, 1, 1], [], []>} : vector<16x40xbf16>, vector<40x40xbf16>, vector<16x40xf32> -> vector<16x40xf32>
    %c0_12 = arith.constant 0 : index
    %c0_13 = arith.constant 0 : index
    %15 = vector.load %arg8[%c0_12, %c0_13] : memref<1x40xf32, #tpu.memory_space<vmem>>, vector<1x40xf32>
    %16 = vector.broadcast %15 : vector<1x40xf32> to vector<16x40xf32>
    %17 = arith.addf %14, %16 : vector<16x40xf32>
    %c0_14 = arith.constant 0 : index
    %c0_15 = arith.constant 0 : index
    %18 = vector.load %arg9[%c0_14, %c0_15] : memref<40x40xbf16, #tpu.memory_space<vmem>>, vector<40x40xbf16>
    %cst_16 = arith.constant dense<0.000000e+00> : vector<16x40xf32>
    %19 = tpu.matmul %7, %18, %cst_16 {dimension_numbers = #tpu.dot_dimension_numbers<[1], [0], [0], [1], [0, 0, 1, 1], [], []>} : vector<16x40xbf16>, vector<40x40xbf16>, vector<16x40xf32> -> vector<16x40xf32>
    %c0_17 = arith.constant 0 : index
    %c0_18 = arith.constant 0 : index
    %20 = vector.load %arg10[%c0_17, %c0_18] : memref<1x40xf32, #tpu.memory_space<vmem>>, vector<1x40xf32>
    %21 = vector.broadcast %20 : vector<1x40xf32> to vector<16x40xf32>
    %22 = arith.addf %19, %21 : vector<16x40xf32>
    %c0_19 = arith.constant 0 : index
    %c0_20 = arith.constant 0 : index
    %c0_21 = arith.constant 0 : index
    %23 = vector.load %arg4[%c0_19, %c0_20, %c0_21] : memref<10x1x40xf32, #tpu.memory_space<vmem>>, vector<10x1x40xf32>
    %24 = vector.shape_cast %12 : vector<16x40xf32> to vector<1x16x40xf32>
    %25 = vector.broadcast %24 : vector<1x16x40xf32> to vector<10x16x40xf32>
    %26 = vector.broadcast %23 : vector<10x1x40xf32> to vector<10x16x40xf32>
    %27 = arith.mulf %25, %26 : vector<10x16x40xf32>
    %28 = arith.truncf %27 : vector<10x16x40xf32> to vector<10x16x40xbf16>
    %29 = arith.truncf %17 : vector<16x40xf32> to vector<16x40xbf16>
    %30 = vector.shape_cast %29 : vector<16x40xbf16> to vector<1x16x40xbf16>
    %31 = vector.shape_cast %30 : vector<1x16x40xbf16> to vector<1x16x40xbf16>
    %32 = vector.broadcast %31 : vector<1x16x40xbf16> to vector<10x16x40xbf16>
    "tpu.trace_start"() <{level = 10 : i32, message = "hre,hte->hrt"}> : () -> ()
    %cst_22 = arith.constant dense<0.000000e+00> : vector<10x16x16xf32>
    %33 = tpu.matmul %28, %32, %cst_22 {dimension_numbers = #tpu.dot_dimension_numbers<[2], [2], [1], [1], [0, 0, 0, 1, 1, 1], [0], [0]>} : vector<10x16x40xbf16>, vector<10x16x40xbf16>, vector<10x16x16xf32> -> vector<10x16x16xf32>
    "tpu.trace_stop"() : () -> ()
    %c0_23 = arith.constant 0 : index
    %c0_24 = arith.constant 0 : index
    %34 = vector.load %arg3[%c0_23, %c0_24] : memref<16x16xf32, #tpu.memory_space<vmem>>, vector<16x16xf32>
    %35 = vector.shape_cast %34 : vector<16x16xf32> to vector<1x16x16xf32>
    %36 = vector.broadcast %35 : vector<1x16x16xf32> to vector<10x16x16xf32>
    %37 = arith.addf %33, %36 : vector<10x16x16xf32>
    %cst_25 = arith.constant dense<0xFF800000> : vector<10x16xf32>
    %38 = vector.multi_reduction <maximumf>, %37, %cst_25 [2] : vector<10x16x16xf32> to vector<10x16xf32>
    %cst_26 = arith.constant 0xFF800000 : f32
    %39 = vector.broadcast %cst_26 : f32 to vector<10x16xf32>
    %40 = arith.maximumf %39, %38 : vector<10x16xf32>
    %41 = vector.shape_cast %40 : vector<10x16xf32> to vector<10x16x1xf32>
    %42 = vector.broadcast %41 : vector<10x16x1xf32> to vector<10x16x16xf32>
    %43 = arith.subf %37, %42 : vector<10x16x16xf32>
    %44 = math.exp %43 : vector<10x16x16xf32>
    %cst_27 = arith.constant dense<0.000000e+00> : vector<10x16xf32>
    %45 = vector.multi_reduction <add>, %44, %cst_27 [2] : vector<10x16x16xf32> to vector<10x16xf32>
    %46 = vector.shape_cast %45 : vector<10x16xf32> to vector<10x16x1xf32>
    %47 = vector.broadcast %46 : vector<10x16x1xf32> to vector<10x16x16xf32>
    %48 = arith.divf %44, %47 : vector<10x16x16xf32>
    %49 = vector.shape_cast %22 : vector<16x40xf32> to vector<1x16x40xf32>
    %50 = vector.broadcast %49 : vector<1x16x40xf32> to vector<10x16x40xf32>
    %51 = vector.broadcast %23 : vector<10x1x40xf32> to vector<10x16x40xf32>
    %52 = arith.mulf %50, %51 : vector<10x16x40xf32>
    %53 = arith.truncf %52 : vector<10x16x40xf32> to vector<10x16x40xbf16>
    %54 = arith.truncf %48 : vector<10x16x16xf32> to vector<10x16x16xbf16>
    "tpu.trace_start"() <{level = 10 : i32, message = "hrt,hte->hre"}> : () -> ()
    %cst_28 = arith.constant dense<0.000000e+00> : vector<10x16x40xf32>
    %55 = tpu.matmul %54, %53, %cst_28 {dimension_numbers = #tpu.dot_dimension_numbers<[2], [1], [1], [2], [0, 0, 0, 1, 1, 2], [0], [0]>} : vector<10x16x16xbf16>, vector<10x16x40xbf16>, vector<10x16x40xf32> -> vector<10x16x40xf32>
    "tpu.trace_stop"() : () -> ()
    %cst_29 = arith.constant dense<0.000000e+00> : vector<16x40xf32>
    %56 = vector.multi_reduction <add>, %55, %cst_29 [0] : vector<10x16x40xf32> to vector<16x40xf32>
    %57 = arith.truncf %56 : vector<16x40xf32> to vector<16x40xbf16>
    %c0_30 = arith.constant 0 : index
    %c0_31 = arith.constant 0 : index
    %58 = vector.load %arg11[%c0_30, %c0_31] : memref<40x40xbf16, #tpu.memory_space<vmem>>, vector<40x40xbf16>
    %cst_32 = arith.constant dense<0.000000e+00> : vector<16x40xf32>
    %59 = tpu.matmul %57, %58, %cst_32 {dimension_numbers = #tpu.dot_dimension_numbers<[1], [0], [0], [1], [0, 0, 1, 1], [], []>} : vector<16x40xbf16>, vector<40x40xbf16>, vector<16x40xf32> -> vector<16x40xf32>
    %c0_33 = arith.constant 0 : index
    %c0_34 = arith.constant 0 : index
    %60 = vector.load %arg12[%c0_33, %c0_34] : memref<1x40xf32, #tpu.memory_space<vmem>>, vector<1x40xf32>
    %61 = vector.broadcast %60 : vector<1x40xf32> to vector<16x40xf32>
    %62 = arith.addf %59, %61 : vector<16x40xf32>
    %63 = arith.addf %6, %62 : vector<16x40xf32>
    %c0_35 = arith.constant 0 : index
    %c0_36 = arith.constant 0 : index
    %64 = vector.load %arg13[%c0_35, %c0_36] : memref<1x40xf32, #tpu.memory_space<vmem>>, vector<1x40xf32>
    %c0_37 = arith.constant 0 : index
    %c0_38 = arith.constant 0 : index
    %65 = vector.load %arg14[%c0_37, %c0_38] : memref<1x40xf32, #tpu.memory_space<vmem>>, vector<1x40xf32>
    %cst_39 = arith.constant dense<0.000000e+00> : vector<16xf32>
    %66 = vector.multi_reduction <add>, %63, %cst_39 [1] : vector<16x40xf32> to vector<16xf32>
    %67 = vector.shape_cast %66 : vector<16xf32> to vector<16x1xf32>
    %cst_40 = arith.constant 4.000000e+01 : f32
    %68 = vector.broadcast %cst_40 : f32 to vector<16x1xf32>
    %69 = arith.divf %67, %68 : vector<16x1xf32>
    %70 = vector.broadcast %69 : vector<16x1xf32> to vector<16x40xf32>
    %71 = arith.subf %63, %70 : vector<16x40xf32>
    %72 = arith.mulf %71, %71 : vector<16x40xf32>
    %cst_41 = arith.constant dense<0.000000e+00> : vector<16xf32>
    %73 = vector.multi_reduction <add>, %72, %cst_41 [1] : vector<16x40xf32> to vector<16xf32>
    %74 = vector.shape_cast %73 : vector<16xf32> to vector<16x1xf32>
    %cst_42 = arith.constant 4.000000e+01 : f32
    %75 = vector.broadcast %cst_42 : f32 to vector<16x1xf32>
    %76 = arith.divf %74, %75 : vector<16x1xf32>
    %77 = vector.broadcast %69 : vector<16x1xf32> to vector<16x40xf32>
    %78 = arith.subf %63, %77 : vector<16x40xf32>
    %cst_43 = arith.constant 9.99999974E-6 : f32
    %79 = vector.broadcast %cst_43 : f32 to vector<16x1xf32>
    %80 = arith.addf %76, %79 : vector<16x1xf32>
    %81 = math.rsqrt %80 : vector<16x1xf32>
    %82 = vector.broadcast %81 : vector<16x1xf32> to vector<16x40xf32>
    %83 = arith.mulf %78, %82 : vector<16x40xf32>
    %84 = vector.broadcast %64 : vector<1x40xf32> to vector<16x40xf32>
    %85 = arith.mulf %83, %84 : vector<16x40xf32>
    %86 = vector.broadcast %65 : vector<1x40xf32> to vector<16x40xf32>
    %87 = arith.addf %85, %86 : vector<16x40xf32>
    %88 = arith.truncf %87 : vector<16x40xf32> to vector<16x40xbf16>
    %c0_44 = arith.constant 0 : index
    %c0_45 = arith.constant 0 : index
    %89 = vector.load %arg15[%c0_44, %c0_45] : memref<40x128xbf16, #tpu.memory_space<vmem>>, vector<40x128xbf16>
    %cst_46 = arith.constant dense<0.000000e+00> : vector<16x128xf32>
    %90 = tpu.matmul %88, %89, %cst_46 {dimension_numbers = #tpu.dot_dimension_numbers<[1], [0], [0], [1], [0, 0, 1, 1], [], []>} : vector<16x40xbf16>, vector<40x128xbf16>, vector<16x128xf32> -> vector<16x128xf32>
    %c0_47 = arith.constant 0 : index
    %c0_48 = arith.constant 0 : index
    %91 = vector.load %arg16[%c0_47, %c0_48] : memref<1x128xf32, #tpu.memory_space<vmem>>, vector<1x128xf32>
    %92 = vector.broadcast %91 : vector<1x128xf32> to vector<16x128xf32>
    %93 = arith.addf %90, %92 : vector<16x128xf32>
    %cst_49 = arith.constant 0.000000e+00 : f32
    %94 = vector.broadcast %cst_49 : f32 to vector<16x128xf32>
    %95 = arith.maximumf %93, %94 : vector<16x128xf32>
    %96 = arith.truncf %95 : vector<16x128xf32> to vector<16x128xbf16>
    %c0_50 = arith.constant 0 : index
    %c0_51 = arith.constant 0 : index
    %97 = vector.load %arg17[%c0_50, %c0_51] : memref<128x40xbf16, #tpu.memory_space<vmem>>, vector<128x40xbf16>
    %cst_52 = arith.constant dense<0.000000e+00> : vector<16x40xf32>
    %98 = tpu.matmul %96, %97, %cst_52 {dimension_numbers = #tpu.dot_dimension_numbers<[1], [0], [0], [1], [0, 0, 1, 1], [], []>} : vector<16x128xbf16>, vector<128x40xbf16>, vector<16x40xf32> -> vector<16x40xf32>
    %c0_53 = arith.constant 0 : index
    %c0_54 = arith.constant 0 : index
    %99 = vector.load %arg18[%c0_53, %c0_54] : memref<1x40xf32, #tpu.memory_space<vmem>>, vector<1x40xf32>
    %100 = vector.broadcast %99 : vector<1x40xf32> to vector<16x40xf32>
    %101 = arith.addf %98, %100 : vector<16x40xf32>
    %102 = arith.addf %87, %101 : vector<16x40xf32>
    %c0_55 = arith.constant 0 : index
    %c0_56 = arith.constant 0 : index
    %103 = vector.load %arg19[%c0_55, %c0_56] : memref<1x40xf32, #tpu.memory_space<vmem>>, vector<1x40xf32>
    %c0_57 = arith.constant 0 : index
    %c0_58 = arith.constant 0 : index
    %104 = vector.load %arg20[%c0_57, %c0_58] : memref<1x40xf32, #tpu.memory_space<vmem>>, vector<1x40xf32>
    %cst_59 = arith.constant dense<0.000000e+00> : vector<16xf32>
    %105 = vector.multi_reduction <add>, %102, %cst_59 [1] : vector<16x40xf32> to vector<16xf32>
    %106 = vector.shape_cast %105 : vector<16xf32> to vector<16x1xf32>
    %cst_60 = arith.constant 4.000000e+01 : f32
    %107 = vector.broadcast %cst_60 : f32 to vector<16x1xf32>
    %108 = arith.divf %106, %107 : vector<16x1xf32>
    %109 = vector.broadcast %108 : vector<16x1xf32> to vector<16x40xf32>
    %110 = arith.subf %102, %109 : vector<16x40xf32>
    %111 = arith.mulf %110, %110 : vector<16x40xf32>
    %cst_61 = arith.constant dense<0.000000e+00> : vector<16xf32>
    %112 = vector.multi_reduction <add>, %111, %cst_61 [1] : vector<16x40xf32> to vector<16xf32>
    %113 = vector.shape_cast %112 : vector<16xf32> to vector<16x1xf32>
    %cst_62 = arith.constant 4.000000e+01 : f32
    %114 = vector.broadcast %cst_62 : f32 to vector<16x1xf32>
    %115 = arith.divf %113, %114 : vector<16x1xf32>
    %116 = vector.broadcast %108 : vector<16x1xf32> to vector<16x40xf32>
    %117 = arith.subf %102, %116 : vector<16x40xf32>
    %cst_63 = arith.constant 9.99999974E-6 : f32
    %118 = vector.broadcast %cst_63 : f32 to vector<16x1xf32>
    %119 = arith.addf %115, %118 : vector<16x1xf32>
    %120 = math.rsqrt %119 : vector<16x1xf32>
    %121 = vector.broadcast %120 : vector<16x1xf32> to vector<16x40xf32>
    %122 = arith.mulf %117, %121 : vector<16x40xf32>
    %123 = vector.broadcast %103 : vector<1x40xf32> to vector<16x40xf32>
    %124 = arith.mulf %122, %123 : vector<16x40xf32>
    %125 = vector.broadcast %104 : vector<1x40xf32> to vector<16x40xf32>
    %126 = arith.addf %124, %125 : vector<16x40xf32>
    %127 = vector.shape_cast %126 : vector<16x40xf32> to vector<2x8x40xf32>
    %c0_64 = arith.constant 0 : index
    %c0_65 = arith.constant 0 : index
    %c0_66 = arith.constant 0 : index
    %128 = vector.load %arg21[%c0_64, %c0_65, %c0_66] : memref<1x1x40xf32, #tpu.memory_space<vmem>>, vector<1x1x40xf32>
    %129 = vector.broadcast %128 : vector<1x1x40xf32> to vector<2x8x40xf32>
    %130 = arith.mulf %127, %129 : vector<2x8x40xf32>
    %cst_67 = arith.constant dense<0.000000e+00> : vector<2x8xf32>
    %131 = vector.multi_reduction <add>, %130, %cst_67 [2] : vector<2x8x40xf32> to vector<2x8xf32>
    %c0_68 = arith.constant 0 : index
    %c0_69 = arith.constant 0 : index
    %132 = vector.load %arg22[%c0_68, %c0_69] : memref<1x1xf32, #tpu.memory_space<vmem>>, vector<1x1xf32>
    %133 = vector.broadcast %132 : vector<1x1xf32> to vector<2x8xf32>
    %134 = arith.addf %131, %133 : vector<2x8xf32>
    %c0_70 = arith.constant 0 : index
    %c0_71 = arith.constant 0 : index
    %c0_72 = arith.constant 0 : index
    %135 = vector.load %arg23[%c0_70, %c0_71, %c0_72] : memref<1x2x8xf32, #tpu.memory_space<vmem>>, vector<1x2x8xf32>
    %136 = vector.shape_cast %135 : vector<1x2x8xf32> to vector<2x8xf32>
    %137 = vector.shape_cast %134 : vector<2x8xf32> to vector<1x2x8xf32>
    tpu.vector_store %arg23[%c0_70, %c0_71, %c0_72], %137 {strides = array<i32>} : memref<1x2x8xf32, #tpu.memory_space<vmem>>, vector<1x2x8xf32>,
    return
  }
  func.func @transform_0(%arg0: i32) -> (i32, i32, i32, i32) {
    %c0_i32 = arith.constant 0 : i32
    %c0_i32_0 = arith.constant 0 : i32
    %c0_i32_1 = arith.constant 0 : i32
    %c0_i32_2 = arith.constant 0 : i32
    return %arg0, %c0_i32, %c0_i32_0, %c0_i32_1 : i32, i32, i32, i32
  }
  func.func @transform_1(%arg0: i32) -> (i32, i32) {
    %c0_i32 = arith.constant 0 : i32
    %c0_i32_0 = arith.constant 0 : i32
    %c0_i32_1 = arith.constant 0 : i32
    return %c0_i32, %c0_i32_0 : i32, i32
  }
  func.func @transform_2(%arg0: i32) -> (i32, i32) {
    %c0_i32 = arith.constant 0 : i32
    %c0_i32_0 = arith.constant 0 : i32
    %c0_i32_1 = arith.constant 0 : i32
    return %c0_i32, %c0_i32_0 : i32, i32
  }
  func.func @transform_3(%arg0: i32) -> (i32, i32, i32) {
    %c0_i32 = arith.constant 0 : i32
    %c0_i32_0 = arith.constant 0 : i32
    %c0_i32_1 = arith.constant 0 : i32
    %c0_i32_2 = arith.constant 0 : i32
    return %c0_i32, %c0_i32_0, %c0_i32_1 : i32, i32, i32
  }
  func.func @transform_4(%arg0: i32) -> (i32, i32) {
    %c0_i32 = arith.constant 0 : i32
    %c0_i32_0 = arith.constant 0 : i32
    %c0_i32_1 = arith.constant 0 : i32
    return %c0_i32, %c0_i32_0 : i32, i32
  }
  func.func @transform_5(%arg0: i32) -> (i32, i32) {
    %c0_i32 = arith.constant 0 : i32
    %c0_i32_0 = arith.constant 0 : i32
    %c0_i32_1 = arith.constant 0 : i32
    return %c0_i32, %c0_i32_0 : i32, i32
  }
  func.func @transform_6(%arg0: i32) -> (i32, i32) {
    %c0_i32 = arith.constant 0 : i32
    %c0_i32_0 = arith.constant 0 : i32
    %c0_i32_1 = arith.constant 0 : i32
    return %c0_i32, %c0_i32_0 : i32, i32
  }
  func.func @transform_7(%arg0: i32) -> (i32, i32) {
    %c0_i32 = arith.constant 0 : i32
    %c0_i32_0 = arith.constant 0 : i32
    %c0_i32_1 = arith.constant 0 : i32
    return %c0_i32, %c0_i32_0 : i32, i32
  }
  func.func @transform_8(%arg0: i32) -> (i32, i32) {
    %c0_i32 = arith.constant 0 : i32
    %c0_i32_0 = arith.constant 0 : i32
    %c0_i32_1 = arith.constant 0 : i32
    return %c0_i32, %c0_i32_0 : i32, i32
  }
  func.func @transform_9(%arg0: i32) -> (i32, i32) {
    %c0_i32 = arith.constant 0 : i32
    %c0_i32_0 = arith.constant 0 : i32
    %c0_i32_1 = arith.constant 0 : i32
    return %c0_i32, %c0_i32_0 : i32, i32
  }
  func.func @transform_10(%arg0: i32) -> (i32, i32) {
    %c0_i32 = arith.constant 0 : i32
    %c0_i32_0 = arith.constant 0 : i32
    %c0_i32_1 = arith.constant 0 : i32
    return %c0_i32, %c0_i32_0 : i32, i32
  }
  func.func @transform_11(%arg0: i32) -> (i32, i32) {
    %c0_i32 = arith.constant 0 : i32
    %c0_i32_0 = arith.constant 0 : i32
    %c0_i32_1 = arith.constant 0 : i32
    return %c0_i32, %c0_i32_0 : i32, i32
  }
  func.func @transform_12(%arg0: i32) -> (i32, i32) {
    %c0_i32 = arith.constant 0 : i32
    %c0_i32_0 = arith.constant 0 : i32
    %c0_i32_1 = arith.constant 0 : i32
    return %c0_i32, %c0_i32_0 : i32, i32
  }
  func.func @transform_13(%arg0: i32) -> (i32, i32) {
    %c0_i32 = arith.constant 0 : i32
    %c0_i32_0 = arith.constant 0 : i32
    %c0_i32_1 = arith.constant 0 : i32
    return %c0_i32, %c0_i32_0 : i32, i32
  }
  func.func @transform_14(%arg0: i32) -> (i32, i32) {
    %c0_i32 = arith.constant 0 : i32
    %c0_i32_0 = arith.constant 0 : i32
    %c0_i32_1 = arith.constant 0 : i32
    return %c0_i32, %c0_i32_0 : i32, i32
  }
  func.func @transform_15(%arg0: i32) -> (i32, i32) {
    %c0_i32 = arith.constant 0 : i32
    %c0_i32_0 = arith.constant 0 : i32
    %c0_i32_1 = arith.constant 0 : i32
    return %c0_i32, %c0_i32_0 : i32, i32
  }
  func.func @transform_16(%arg0: i32) -> (i32, i32) {
    %c0_i32 = arith.constant 0 : i32
    %c0_i32_0 = arith.constant 0 : i32
    %c0_i32_1 = arith.constant 0 : i32
    return %c0_i32, %c0_i32_0 : i32, i32
  }
  func.func @transform_17(%arg0: i32) -> (i32, i32) {
    %c0_i32 = arith.constant 0 : i32
    %c0_i32_0 = arith.constant 0 : i32
    %c0_i32_1 = arith.constant 0 : i32
    return %c0_i32, %c0_i32_0 : i32, i32
  }
  func.func @transform_18(%arg0: i32) -> (i32, i32) {
    %c0_i32 = arith.constant 0 : i32
    %c0_i32_0 = arith.constant 0 : i32
    %c0_i32_1 = arith.constant 0 : i32
    return %c0_i32, %c0_i32_0 : i32, i32
  }
  func.func @transform_19(%arg0: i32) -> (i32, i32) {
    %c0_i32 = arith.constant 0 : i32
    %c0_i32_0 = arith.constant 0 : i32
    %c0_i32_1 = arith.constant 0 : i32
    return %c0_i32, %c0_i32_0 : i32, i32
  }
  func.func @transform_20(%arg0: i32) -> (i32, i32, i32) {
    %c0_i32 = arith.constant 0 : i32
    %c0_i32_0 = arith.constant 0 : i32
    %c0_i32_1 = arith.constant 0 : i32
    %c0_i32_2 = arith.constant 0 : i32
    return %c0_i32, %c0_i32_0, %c0_i32_1 : i32, i32, i32
  }
  func.func @transform_21(%arg0: i32) -> (i32, i32) {
    %c0_i32 = arith.constant 0 : i32
    %c0_i32_0 = arith.constant 0 : i32
    %c0_i32_1 = arith.constant 0 : i32
    return %c0_i32, %c0_i32_0 : i32, i32
  }
  func.func @transform_22(%arg0: i32) -> (i32, i32, i32) {
    %c0_i32 = arith.constant 0 : i32
    %c0_i32_0 = arith.constant 0 : i32
    %c0_i32_1 = arith.constant 0 : i32
    return %arg0, %c0_i32, %c0_i32_0 : i32, i32, i32
  }
}

</mosaic_0001>

<llo_original>
// kernel: tpu_custom_call.1
$region0: #{tpu_custom_call.1}
  #allocation0 [shape = 'u32[]', space=smem, size = 0x4, offset = 0x4, fixed_abs, tag = 'smem constant byte address 0x4 - core index']
  #allocation1 [shape = 'u32[144,128]{1,0:T(1,128)}', space=vmem, size = 0x12000, scoped, tag = 'internal scratch']
  #allocation2 [shape = 'f32[1,1]{1,0:T(1,128)S(1)}', space=vmem, size = 0x200, scoped, tag = 'scoped memory for tpu_custom_call.1']
  %s0 = inlined_call_operand.hbm [shape: f32[1,2,8,40], index: 0, kind: input, shape index: {}]
  %s1 = inlined_call_operand.hbm [shape: f32[8,40], index: 1, kind: input, shape index: {}]
  %s2 = inlined_call_operand.hbm [shape: f32[16,16], index: 2, kind: input, shape index: {}]
  %s3 = inlined_call_operand.hbm [shape: f32[10,1,40], index: 3, kind: input, shape index: {}]
  %s4 = inlined_call_operand.vmem [shape: bf16[40,40], index: 4, kind: input, shape index: {}]
  %s5 = inlined_call_operand.vmem [shape: f32[1,40], index: 5, kind: input, shape index: {}]
  %s6 = inlined_call_operand.vmem [shape: bf16[40,40], index: 6, kind: input, shape index: {}]
  %s7 = inlined_call_operand.vmem [shape: f32[1,40], index: 7, kind: input, shape index: {}]
  %s8 = inlined_call_operand.vmem [shape: bf16[40,40], index: 8, kind: input, shape index: {}]
  %s9 = inlined_call_operand.vmem [shape: f32[1,40], index: 9, kind: input, shape index: {}]
  %s10 = inlined_call_operand.vmem [shape: bf16[40,40], index: 10, kind: input, shape index: {}]
  %s11 = inlined_call_operand.vmem [shape: f32[1,40], index: 11, kind: input, shape index: {}]
  %s12 = inlined_call_operand.vmem [shape: f32[1,40], index: 12, kind: input, shape index: {}]
  %s13 = inlined_call_operand.vmem [shape: f32[1,40], index: 13, kind: input, shape index: {}]
  %s14 = inlined_call_operand.vmem [shape: bf16[40,128], index: 14, kind: input, shape index: {}]
  %s15 = inlined_call_operand.vmem [shape: f32[1,128], index: 15, kind: input, shape index: {}]
  %s16 = inlined_call_operand.vmem [shape: bf16[128,40], index: 16, kind: input, shape index: {}]
  %s17 = inlined_call_operand.vmem [shape: f32[1,40], index: 17, kind: input, shape index: {}]
  %s18 = inlined_call_operand.vmem [shape: f32[1,40], index: 18, kind: input, shape index: {}]
  %s19 = inlined_call_operand.vmem [shape: f32[1,40], index: 19, kind: input, shape index: {}]
  %s20 = inlined_call_operand.vmem [shape: f32[1,1,40], index: 20, kind: input, shape index: {}]
  %s21 = inlined_call_operand.<no memory space> [shape: f32[1,1], index: 21, kind: input, shape index: {}]
  %s22 = inlined_call_operand.hbm [shape: f32[1,2,8], index: 22, kind: output, shape index: {}]
  %s23 = sld [smem:[#allocation0]]
  $region114: #{tpu_custom_call.1} parent=0
    _
  %s25 = ssub.s32 1, %s23
  %s26 = scalar_select 0, %s25, %s23
  %v27 = vstv %s21
  %28 = vst [vmem:[#allocation2] sm:$0x1] %v27
  $region1: #{tpu_custom_call.1} parent=0
    #allocation3 [shape = 'u8[8192]{0}', space=vmem, size = 0x2000, scoped, tag = 'input window, operand 0, single buffered']
    #allocation4 [shape = 's32[1]{0}', space=sflag, size = 0x4, scoped, tag = 'scoped memory for tpu_custom_call.1']
    #allocation5 [shape = 's32[1]{0}', space=sflag, size = 0x4, scoped, tag = 'scoped memory for tpu_custom_call.1']
    #allocation6 [shape = 'u8[4096]{0}', space=vmem, size = 0x1000, scoped, tag = 'input window, operand 1, single buffered']
    #allocation7 [shape = 's32[1]{0}', space=sflag, size = 0x4, scoped, tag = 'scoped memory for tpu_custom_call.1']
    #allocation8 [shape = 'u8[8192]{0}', space=vmem, size = 0x2000, scoped, tag = 'input window, operand 2, single buffered']
    #allocation9 [shape = 'u8[5120]{0}', space=vmem, size = 0x1400, scoped, tag = 'input window, operand 3, single buffered']
    #allocation10 [shape = 's32[1]{0}', space=sflag, size = 0x4, scoped, tag = 'scoped memory for tpu_custom_call.1']
    #allocation11 [shape = 'u8[1024]{0}', space=vmem, size = 0x400, scoped, tag = 'output window, operand 0, single buffered']
    %29 = vsyncpa [#allocation4], 0
    %30 = vsyncpa [#allocation7], 0
    %31 = vsyncpa [#allocation10], 0
    %32 = vsyncpa [#allocation5], 0
    // Predicated region
    $region2: #{tpu_custom_call.1} parent=1 // pred_check
      _
    $region3: #{tpu_custom_call.1} parent=1 // pred_check_branch
      %34 = sbr.rel (0) target = $region5
    $region4: #{tpu_custom_call.1} parent=1 // pred_region
      %s36 = ssub.s32 256, 256
      %37 = vsyncadd [#allocation4], %s36
      %s38 = sshll.u32 [#allocation3], 4
      %s39 = int_to_ptr.vmem [resolvable:$true] %s38
      %44 = dma.hbm_to_vmem [thread:$0]  %s0, 256, %s39, [#allocation4], 128, 128, 8
    $region5: #{tpu_custom_call.1} parent=1 // pred_fallthru
      _
    // Predicated region
    $region6: #{tpu_custom_call.1} parent=1 // pred_check
      _
    $region7: #{tpu_custom_call.1} parent=1 // pred_check_branch
      %46 = sbr.rel (0) target = $region9
    $region8: #{tpu_custom_call.1} parent=1 // pred_region
      %s48 = ssub.s32 128, 128
      %49 = vsyncadd [#allocation7], %s48
      %s51 = sshll.u32 [#allocation6], 4
      %s52 = int_to_ptr.vmem [resolvable:$true] %s51
      %54 = dma.hbm_to_vmem [thread:$0]  %s1, 128, %s52, [#allocation7]
    $region9: #{tpu_custom_call.1} parent=1 // pred_fallthru
      _
    // Predicated region
    $region10: #{tpu_custom_call.1} parent=1 // pred_check
      _
    $region11: #{tpu_custom_call.1} parent=1 // pred_check_branch
      %56 = sbr.rel (0) target = $region13
    $region12: #{tpu_custom_call.1} parent=1 // pred_region
      %s58 = ssub.s32 256, 256
      %59 = vsyncadd [#allocation7], %s58
      %s60 = sshll.u32 [#allocation8], 4
      %s61 = int_to_ptr.vmem [resolvable:$true] %s60
      %66 = dma.hbm_to_vmem [thread:$0]  %s2, 256, %s61, [#allocation7], 128, 128, 8
    $region13: #{tpu_custom_call.1} parent=1 // pred_fallthru
      _
    // Predicated region
    $region14: #{tpu_custom_call.1} parent=1 // pred_check
      _
    $region15: #{tpu_custom_call.1} parent=1 // pred_check_branch
      %68 = sbr.rel (0) target = $region17
    $region16: #{tpu_custom_call.1} parent=1 // pred_region
      %s70 = ssub.s32 160, 160
      %71 = vsyncadd [#allocation10], %s70
      %s72 = sshll.u32 [#allocation9], 4
      %s73 = int_to_ptr.vmem [resolvable:$true] %s72
      %78 = dma.hbm_to_vmem [thread:$0]  %s3, 160, %s73, [#allocation10], 16, 16, 1
    $region17: #{tpu_custom_call.1} parent=1 // pred_fallthru
      _
    // Predicated region
    $region18: #{tpu_custom_call.1} parent=1 // pred_check
      _
    $region19: #{tpu_custom_call.1} parent=1 // pred_check_branch
      %80 = sbr.rel (0) target = $region21
    $region20: #{tpu_custom_call.1} parent=1 // pred_region
      _
    $region21: #{tpu_custom_call.1} parent=1 // pred_fallthru
      _
    // Predicated region
    $region22: #{tpu_custom_call.1} parent=1 // pred_check
      _
    $region23: #{tpu_custom_call.1} parent=1 // pred_check_branch
      %82 = sbr.rel (0) target = $region25
    $region24: #{tpu_custom_call.1} parent=1 // pred_region
      _
    $region25: #{tpu_custom_call.1} parent=1 // pred_fallthru
      _
    // Predicated region
    $region26: #{tpu_custom_call.1} parent=1 // pred_check
      _
    $region27: #{tpu_custom_call.1} parent=1 // pred_check_branch
      %84 = sbr.rel (0) target = $region29
    $region28: #{tpu_custom_call.1} parent=1 // pred_region
      _
    $region29: #{tpu_custom_call.1} parent=1 // pred_fallthru
      _
    // Predicated region
    $region30: #{tpu_custom_call.1} parent=1 // pred_check
      _
    $region31: #{tpu_custom_call.1} parent=1 // pred_check_branch
      %86 = sbr.rel (0) target = $region33
    $region32: #{tpu_custom_call.1} parent=1 // pred_region
      _
    $region33: #{tpu_custom_call.1} parent=1 // pred_fallthru
      _
    // Predicated region
    $region34: #{tpu_custom_call.1} parent=1 // pred_check
      _
    $region35: #{tpu_custom_call.1} parent=1 // pred_check_branch
      %88 = sbr.rel (0) target = $region37
    $region36: #{tpu_custom_call.1} parent=1 // pred_region
      _
    $region37: #{tpu_custom_call.1} parent=1 // pred_fallthru
      _
    // Predicated region
    $region38: #{tpu_custom_call.1} parent=1 // pred_check
      _
    $region39: #{tpu_custom_call.1} parent=1 // pred_check_branch
      %90 = sbr.rel (0) target = $region41
    $region40: #{tpu_custom_call.1} parent=1 // pred_region
      _
    $region41: #{tpu_custom_call.1} parent=1 // pred_fallthru
      _
    // Predicated region
    $region42: #{tpu_custom_call.1} parent=1 // pred_check
      _
    $region43: #{tpu_custom_call.1} parent=1 // pred_check_branch
      %92 = sbr.rel (0) target = $region45
    $region44: #{tpu_custom_call.1} parent=1 // pred_region
      _
    $region45: #{tpu_custom_call.1} parent=1 // pred_fallthru
      _
    // Predicated region
    $region46: #{tpu_custom_call.1} parent=1 // pred_check
      _
    $region47: #{tpu_custom_call.1} parent=1 // pred_check_branch
      %94 = sbr.rel (0) target = $region49
    $region48: #{tpu_custom_call.1} parent=1 // pred_region
      _
    $region49: #{tpu_custom_call.1} parent=1 // pred_fallthru
      _
    // Predicated region
    $region50: #{tpu_custom_call.1} parent=1 // pred_check
      _
    $region51: #{tpu_custom_call.1} parent=1 // pred_check_branch
      %96 = sbr.rel (0) target = $region53
    $region52: #{tpu_custom_call.1} parent=1 // pred_region
      _
    $region53: #{tpu_custom_call.1} parent=1 // pred_fallthru
      _
    // Predicated region
    $region54: #{tpu_custom_call.1} parent=1 // pred_check
      _
    $region55: #{tpu_custom_call.1} parent=1 // pred_check_branch
      %98 = sbr.rel (0) target = $region57
    $region56: #{tpu_custom_call.1} parent=1 // pred_region
      _
    $region57: #{tpu_custom_call.1} parent=1 // pred_fallthru
      _
    // Predicated region
    $region58: #{tpu_custom_call.1} parent=1 // pred_check
      _
    $region59: #{tpu_custom_call.1} parent=1 // pred_check_branch
      %100 = sbr.rel (0) target = $region61
    $region60: #{tpu_custom_call.1} parent=1 // pred_region
      _
    $region61: #{tpu_custom_call.1} parent=1 // pred_fallthru
      _
    // Predicated region
    $region62: #{tpu_custom_call.1} parent=1 // pred_check
      _
    $region63: #{tpu_custom_call.1} parent=1 // pred_check_branch
      %102 = sbr.rel (0) target = $region65
    $region64: #{tpu_custom_call.1} parent=1 // pred_region
      _
    $region65: #{tpu_custom_call.1} parent=1 // pred_fallthru
      _
    // Predicated region
    $region66: #{tpu_custom_call.1} parent=1 // pred_check
      _
    $region67: #{tpu_custom_call.1} parent=1 // pred_check_branch
      %104 = sbr.rel (0) target = $region69
    $region68: #{tpu_custom_call.1} parent=1 // pred_region
      _
    $region69: #{tpu_custom_call.1} parent=1 // pred_fallthru
      _
    // Predicated region
    $region70: #{tpu_custom_call.1} parent=1 // pred_check
      _
    $region71: #{tpu_custom_call.1} parent=1 // pred_check_branch
      %106 = sbr.rel (0) target = $region73
    $region72: #{tpu_custom_call.1} parent=1 // pred_region
      _
    $region73: #{tpu_custom_call.1} parent=1 // pred_fallthru
      _
    // Predicated region
    $region74: #{tpu_custom_call.1} parent=1 // pred_check
      _
    $region75: #{tpu_custom_call.1} parent=1 // pred_check_branch
      %108 = sbr.rel (0) target = $region77
    $region76: #{tpu_custom_call.1} parent=1 // pred_region
      _
    $region77: #{tpu_custom_call.1} parent=1 // pred_fallthru
      _
    // Predicated region
    $region78: #{tpu_custom_call.1} parent=1 // pred_check
      _
    $region79: #{tpu_custom_call.1} parent=1 // pred_check_branch
      %110 = sbr.rel (0) target = $region81
    $region80: #{tpu_custom_call.1} parent=1 // pred_region
      _
    $region81: #{tpu_custom_call.1} parent=1 // pred_fallthru
      _
    // Predicated region
    $region82: #{tpu_custom_call.1} parent=1 // pred_check
      _
    $region83: #{tpu_custom_call.1} parent=1 // pred_check_branch
      %112 = sbr.rel (0) target = $region85
    $region84: #{tpu_custom_call.1} parent=1 // pred_region
      _
    $region85: #{tpu_custom_call.1} parent=1 // pred_fallthru
      _
    // Predicated region
    $region86: #{tpu_custom_call.1} parent=1 // pred_check
      _
    $region87: #{tpu_custom_call.1} parent=1 // pred_check_branch
      %114 = sbr.rel (0) target = $region89
    $region88: #{tpu_custom_call.1} parent=1 // pred_region
      _
    $region89: #{tpu_custom_call.1} parent=1 // pred_fallthru
      _
    // Predicated region
    $region90: #{tpu_custom_call.1} parent=1 // pred_check
      _
    $region91: #{tpu_custom_call.1} parent=1 // pred_check_branch
      %116 = sbr.rel (0) target = $region93
    $region92: #{tpu_custom_call.1} parent=1 // pred_region
      %117 = dma.done [#allocation4], 256
    $region93: #{tpu_custom_call.1} parent=1 // pred_fallthru
      _
    // Predicated region
    $region94: #{tpu_custom_call.1} parent=1 // pred_check
      _
    $region95: #{tpu_custom_call.1} parent=1 // pred_check_branch
      %119 = sbr.rel (0) target = $region97
    $region96: #{tpu_custom_call.1} parent=1 // pred_region
      %120 = dma.done [#allocation7], 128
    $region97: #{tpu_custom_call.1} parent=1 // pred_fallthru
      _
    // Predicated region
    $region98: #{tpu_custom_call.1} parent=1 // pred_check
      _
    $region99: #{tpu_custom_call.1} parent=1 // pred_check_branch
      %122 = sbr.rel (0) target = $region101
    $region100: #{tpu_custom_call.1} parent=1 // pred_region
      %123 = dma.done [#allocation7], 256
    $region101: #{tpu_custom_call.1} parent=1 // pred_fallthru
      _
    // Predicated region
    $region102: #{tpu_custom_call.1} parent=1 // pred_check
      _
    $region103: #{tpu_custom_call.1} parent=1 // pred_check_branch
      %125 = sbr.rel (0) target = $region105
    $region104: #{tpu_custom_call.1} parent=1 // pred_region
      %126 = dma.done [#allocation10], 160
    $region105: #{tpu_custom_call.1} parent=1 // pred_fallthru
      _
    %v128 = vld [vmem:[#allocation3] sm:$0xff]
    %v129 = vld [vmem:[#allocation3 + $0x8] sm:$0xff]
    %v130 = vld [vmem:[#allocation6] sm:$0xff]
    %v131 = vadd.f32 %v128, %v130
    %v132 = vadd.f32 %v129, %v130
    %v133 = vpack.c.bf16 %v132, %v131
    %v134 = vld [vmem:[%s4] sm:$0xf]
    %v135 = vld [vmem:[%s4 + $0x4] sm:$0xf]
    %v136 = vld [vmem:[%s4 + $0x8] sm:$0xf]
    %v137 = vld [vmem:[%s4 + $0xc] sm:$0xf]
    %v138 = vld [vmem:[%s4 + $0x10] sm:$0xf]
    %v139 = vld [vmem:[%s5] sm:$0x1]
    %v141 = vlaneseq
    %v142 = vshrl.u32 %v141, 7
    %v143 = vsub.s32 0, %v142
    %v144 = vrot.slane %v139, %v143
    %v151 = vunpack.c.l.b16 %v134
    %v152 = vunpack.c.l.b16 %v135
    %v153 = vunpack.c.l.b16 %v136
    %v154 = vunpack.c.l.b16 %v137
    %v155 = vunpack.c.l.b16 %v138
    %v156 = vpack.c.b16 %v152, %v151
    %v157 = vpack.c.b16 %v154, %v153
    %v158 = vpack.c.b16 %v155, %v155
    %vm161 = vcmask 326656
    %v163 = vsel %vm161, %v133, 0
    %vm165 = vcmask 1043456
    %v167 = vsel %vm165, %v158, 0
    %169 = vmatprep.subr.bf16.mxu0 0
    %170 = vmatpush1.bf16.msra.mxu0 %v156
    %171 = vmatprep.subr.bf16.mxu0 0
    %172 = vmatpush1.bf16.msra.mxu0 %v157
    %173 = vmatprep.subr.bf16.mxu0 0
    %174 = vmatpush1.bf16.msra.mxu0 %v167
    %175 = vmatprep.subr.bf16.mxu0 0
    %176 = vmatpush1.bf16.msra.mxu0 0
    %177 = vmatprep.subr.bf16.mxu0 0
    %178 = vmatpush1.bf16.msra.mxu0 0
    %179 = vmatprep.subr.bf16.mxu0 0
    %180 = vmatpush1.bf16.msra.mxu0 0
    %181 = vmatprep.subr.bf16.mxu0 0
    %182 = vmatpush1.bf16.msra.mxu0 0
    %183 = vmatprep.subr.bf16.mxu0 0
    %184 = vmatpush1.bf16.msra.mxu0 0
    %185 = vmatprep.subr.bf16.mxu0 0
    %186 = vmatpush1.bf16.msra.mxu0 0
    %187 = vmatprep.subr.bf16.mxu0 0
    %188 = vmatpush1.bf16.msra.mxu0 0
    %189 = vmatprep.subr.bf16.mxu0 0
    %190 = vmatpush1.bf16.msra.mxu0 0
    %191 = vmatprep.subr.bf16.mxu0 0
    %192 = vmatpush1.bf16.msra.mxu0 0
    %193 = vmatprep.subr.bf16.mxu0 0
    %194 = vmatpush1.bf16.msra.mxu0 0
    %195 = vmatprep.subr.bf16.mxu0 0
    %196 = vmatpush1.bf16.msra.mxu0 0
    %197 = vmatprep.subr.bf16.mxu0 0
    %198 = vmatpush1.bf16.msra.mxu0 0
    %199 = vmatprep.subr.bf16.mxu0 0
    %200 = vmatpush1.bf16.msra.mxu0 0
    %201 = vmatprep.mubr.bf16.mxu0 0
    %202 = vmatmul.mubr.bf16.gmra.mrb[0].mxu0 %v163
    %v203 = vpop.f32.mrb[0].mxu0
    %v204 = vadd.f32 %v144, %v203
    %v205 = vpop.f32.mrb[0].mxu0
    %v206 = vpop.f32.mrb[0].mxu0
    %v207 = vadd.f32 %v144, %v206
    %v208 = vpop.f32.mrb[0].mxu0
    %209 = vdwg.mxu0
    %v210 = vld [vmem:[%s6] sm:$0xf]
    %v211 = vld [vmem:[%s6 + $0x4] sm:$0xf]
    %v212 = vld [vmem:[%s6 + $0x8] sm:$0xf]
    %v213 = vld [vmem:[%s6 + $0xc] sm:$0xf]
    %v214 = vld [vmem:[%s6 + $0x10] sm:$0xf]
    %v215 = vld [vmem:[%s7] sm:$0x1]
    %v217 = vlaneseq
    %v218 = vshrl.u32 %v217, 7
    %v219 = vsub.s32 0, %v218
    %v220 = vrot.slane %v215, %v219
    %v227 = vunpack.c.l.b16 %v210
    %v228 = vunpack.c.l.b16 %v211
    %v229 = vunpack.c.l.b16 %v212
    %v230 = vunpack.c.l.b16 %v213
    %v231 = vunpack.c.l.b16 %v214
    %v232 = vpack.c.b16 %v228, %v227
    %v233 = vpack.c.b16 %v230, %v229
    %v234 = vpack.c.b16 %v231, %v231
    %v238 = vsel %vm165, %v234, 0
    %240 = vmatprep.subr.bf16.mxu0 0
    %241 = vmatpush1.bf16.msra.mxu0 %v232
    %242 = vmatprep.subr.bf16.mxu0 0
    %243 = vmatpush1.bf16.msra.mxu0 %v233
    %244 = vmatprep.subr.bf16.mxu0 0
    %245 = vmatpush1.bf16.msra.mxu0 %v238
    %246 = vmatprep.subr.bf16.mxu0 0
    %247 = vmatpush1.bf16.msra.mxu0 0
    %248 = vmatprep.subr.bf16.mxu0 0
    %249 = vmatpush1.bf16.msra.mxu0 0
    %250 = vmatprep.subr.bf16.mxu0 0
    %251 = vmatpush1.bf16.msra.mxu0 0
    %252 = vmatprep.subr.bf16.mxu0 0
    %253 = vmatpush1.bf16.msra.mxu0 0
    %254 = vmatprep.subr.bf16.mxu0 0
    %255 = vmatpush1.bf16.msra.mxu0 0
    %256 = vmatprep.subr.bf16.mxu0 0
    %257 = vmatpush1.bf16.msra.mxu0 0
    %258 = vmatprep.subr.bf16.mxu0 0
    %259 = vmatpush1.bf16.msra.mxu0 0
    %260 = vmatprep.subr.bf16.mxu0 0
    %261 = vmatpush1.bf16.msra.mxu0 0
    %262 = vmatprep.subr.bf16.mxu0 0
    %263 = vmatpush1.bf16.msra.mxu0 0
    %264 = vmatprep.subr.bf16.mxu0 0
    %265 = vmatpush1.bf16.msra.mxu0 0
    %266 = vmatprep.subr.bf16.mxu0 0
    %267 = vmatpush1.bf16.msra.mxu0 0
    %268 = vmatprep.subr.bf16.mxu0 0
    %269 = vmatpush1.bf16.msra.mxu0 0
    %270 = vmatprep.subr.bf16.mxu0 0
    %271 = vmatpush1.bf16.msra.mxu0 0
    %272 = vmatprep.mubr.bf16.mxu0 0
    %273 = vmatmul.mubr.bf16.gmra.mrb[0].mxu0 %v163
    %v274 = vpop.f32.mrb[0].mxu0
    %v275 = vadd.f32 %v220, %v274
    %v276 = vpop.f32.mrb[0].mxu0
    %v277 = vpop.f32.mrb[0].mxu0
    %v278 = vadd.f32 %v220, %v277
    %v279 = vpop.f32.mrb[0].mxu0
    %280 = vdwg.mxu0
    %v281 = vld [vmem:[%s8] sm:$0xf]
    %v282 = vld [vmem:[%s8 + $0x4] sm:$0xf]
    %v283 = vld [vmem:[%s8 + $0x8] sm:$0xf]
    %v284 = vld [vmem:[%s8 + $0xc] sm:$0xf]
    %v285 = vld [vmem:[%s8 + $0x10] sm:$0xf]
    %v286 = vld [vmem:[%s9] sm:$0x1]
    %v288 = vlaneseq
    %v289 = vshrl.u32 %v288, 7
    %v290 = vsub.s32 0, %v289
    %v291 = vrot.slane %v286, %v290
    %v298 = vunpack.c.l.b16 %v281
    %v299 = vunpack.c.l.b16 %v282
    %v300 = vunpack.c.l.b16 %v283
    %v301 = vunpack.c.l.b16 %v284
    %v302 = vunpack.c.l.b16 %v285
    %v303 = vpack.c.b16 %v299, %v298
    %v304 = vpack.c.b16 %v301, %v300
    %v305 = vpack.c.b16 %v302, %v302
    %v309 = vsel %vm165, %v305, 0
    %311 = vmatprep.subr.bf16.mxu0 0
    %312 = vmatpush1.bf16.msra.mxu0 %v303
    %313 = vmatprep.subr.bf16.mxu0 0
    %314 = vmatpush1.bf16.msra.mxu0 %v304
    %315 = vmatprep.subr.bf16.mxu0 0
    %316 = vmatpush1.bf16.msra.mxu0 %v309
    %317 = vmatprep.subr.bf16.mxu0 0
    %318 = vmatpush1.bf16.msra.mxu0 0
    %319 = vmatprep.subr.bf16.mxu0 0
    %320 = vmatpush1.bf16.msra.mxu0 0
    %321 = vmatprep.subr.bf16.mxu0 0
    %322 = vmatpush1.bf16.msra.mxu0 0
    %323 = vmatprep.subr.bf16.mxu0 0
    %324 = vmatpush1.bf16.msra.mxu0 0
    %325 = vmatprep.subr.bf16.mxu0 0
    %326 = vmatpush1.bf16.msra.mxu0 0
    %327 = vmatprep.subr.bf16.mxu0 0
    %328 = vmatpush1.bf16.msra.mxu0 0
    %329 = vmatprep.subr.bf16.mxu0 0
    %330 = vmatpush1.bf16.msra.mxu0 0
    %331 = vmatprep.subr.bf16.mxu0 0
    %332 = vmatpush1.bf16.msra.mxu0 0
    %333 = vmatprep.subr.bf16.mxu0 0
    %334 = vmatpush1.bf16.msra.mxu0 0
    %335 = vmatprep.subr.bf16.mxu0 0
    %336 = vmatpush1.bf16.msra.mxu0 0
    %337 = vmatprep.subr.bf16.mxu0 0
    %338 = vmatpush1.bf16.msra.mxu0 0
    %339 = vmatprep.subr.bf16.mxu0 0
    %340 = vmatpush1.bf16.msra.mxu0 0
    %341 = vmatprep.subr.bf16.mxu0 0
    %342 = vmatpush1.bf16.msra.mxu0 0
    %343 = vmatprep.mubr.bf16.mxu0 0
    %344 = vmatmul.mubr.bf16.gmra.mrb[0].mxu0 %v163
    %v345 = vpop.f32.mrb[0].mxu0
    %v346 = vadd.f32 %v291, %v345
    %v347 = vpop.f32.mrb[0].mxu0
    %v348 = vpop.f32.mrb[0].mxu0
    %v349 = vadd.f32 %v291, %v348
    %v350 = vpop.f32.mrb[0].mxu0
    %351 = vdwg.mxu0
    %v352 = vld [vmem:[#allocation9] sm:$0x1]
    %v353 = vld [vmem:[#allocation9 + $0x1] sm:$0x1]
    %v354 = vld [vmem:[#allocation9 + $0x2] sm:$0x1]
    %v355 = vld [vmem:[#allocation9 + $0x3] sm:$0x1]
    %v356 = vld [vmem:[#allocation9 + $0x4] sm:$0x1]
    %v357 = vld [vmem:[#allocation9 + $0x5] sm:$0x1]
    %v358 = vld [vmem:[#allocation9 + $0x6] sm:$0x1]
    %v359 = vld [vmem:[#allocation9 + $0x7] sm:$0x1]
    %v360 = vld [vmem:[#allocation9 + $0x8] sm:$0x1]
    %v361 = vld [vmem:[#allocation9 + $0x9] sm:$0x1]
    %v372 = vlaneseq
    %v373 = vshrl.u32 %v372, 7
    %v374 = vsub.s32 0, %v373
    %v375 = vrot.slane %v352, %v374
    %v376 = vlaneseq
    %v377 = vshrl.u32 %v376, 7
    %v378 = vsub.s32 0, %v377
    %v379 = vrot.slane %v353, %v378
    %v380 = vlaneseq
    %v381 = vshrl.u32 %v380, 7
    %v382 = vsub.s32 0, %v381
    %v383 = vrot.slane %v354, %v382
    %v384 = vlaneseq
    %v385 = vshrl.u32 %v384, 7
    %v386 = vsub.s32 0, %v385
    %v387 = vrot.slane %v355, %v386
    %v388 = vlaneseq
    %v389 = vshrl.u32 %v388, 7
    %v390 = vsub.s32 0, %v389
    %v391 = vrot.slane %v356, %v390
    %v392 = vlaneseq
    %v393 = vshrl.u32 %v392, 7
    %v394 = vsub.s32 0, %v393
    %v395 = vrot.slane %v357, %v394
    %v396 = vlaneseq
    %v397 = vshrl.u32 %v396, 7
    %v398 = vsub.s32 0, %v397
    %v399 = vrot.slane %v358, %v398
    %v400 = vlaneseq
    %v401 = vshrl.u32 %v400, 7
    %v402 = vsub.s32 0, %v401
    %v403 = vrot.slane %v359, %v402
    %v404 = vlaneseq
    %v405 = vshrl.u32 %v404, 7
    %v406 = vsub.s32 0, %v405
    %v407 = vrot.slane %v360, %v406
    %v408 = vlaneseq
    %v409 = vshrl.u32 %v408, 7
    %v410 = vsub.s32 0, %v409
    %v411 = vrot.slane %v361, %v410
    %v422 = vmul.f32 %v204, %v375
    %v423 = vmul.f32 %v207, %v375
    %v424 = vmul.f32 %v204, %v379
    %v425 = vmul.f32 %v207, %v379
    %v426 = vmul.f32 %v204, %v383
    %v427 = vmul.f32 %v207, %v383
    %v428 = vmul.f32 %v204, %v387
    %v429 = vmul.f32 %v207, %v387
    %v430 = vmul.f32 %v204, %v391
    %v431 = vmul.f32 %v207, %v391
    %v432 = vmul.f32 %v204, %v395
    %v433 = vmul.f32 %v207, %v395
    %v434 = vmul.f32 %v204, %v399
    %v435 = vmul.f32 %v207, %v399
    %v436 = vmul.f32 %v204, %v403
    %v437 = vmul.f32 %v207, %v403
    %v438 = vmul.f32 %v204, %v407
    %v439 = vmul.f32 %v207, %v407
    %v440 = vmul.f32 %v204, %v411
    %v441 = vmul.f32 %v207, %v411
    %v442 = vpack.c.bf16 %v423, %v422
    %v443 = vpack.c.bf16 %v425, %v424
    %v444 = vpack.c.bf16 %v427, %v426
    %v445 = vpack.c.bf16 %v429, %v428
    %v446 = vpack.c.bf16 %v431, %v430
    %v447 = vpack.c.bf16 %v433, %v432
    %v448 = vpack.c.bf16 %v435, %v434
    %v449 = vpack.c.bf16 %v437, %v436
    %v450 = vpack.c.bf16 %v439, %v438
    %v451 = vpack.c.bf16 %v441, %v440
    %v452 = vpack.c.bf16 %v278, %v275
    %v453 = vld [vmem:[#allocation8] sm:$0xff]
    %v454 = vld [vmem:[#allocation8 + $0x8] sm:$0xff]
    %v456 = vsel %vm161, %v442, 0
    %v459 = vsel %vm161, %v452, 0
    %461 = vmatprep.subr.bf16.mxu0 0
    %462 = vmatpush1.bf16.xpose.msra.mxu0 %v459
    %463 = vmatprep.subr.bf16.mxu0 0
    %464 = vmatpush1.bf16.xpose.msra.mxu0 0
    %465 = vmatprep.subr.bf16.mxu0 0
    %466 = vmatpush1.bf16.xpose.msra.mxu0 0
    %467 = vmatprep.subr.bf16.mxu0 0
    %468 = vmatpush1.bf16.xpose.msra.mxu0 0
    %469 = vmatprep.subr.bf16.mxu0 0
    %470 = vmatpush1.bf16.xpose.msra.mxu0 0
    %471 = vmatprep.subr.bf16.mxu0 0
    %472 = vmatpush1.bf16.xpose.msra.mxu0 0
    %473 = vmatprep.subr.bf16.mxu0 0
    %474 = vmatpush1.bf16.xpose.msra.mxu0 0
    %475 = vmatprep.subr.bf16.mxu0 0
    %476 = vmatpush1.bf16.xpose.msra.mxu0 0
    %477 = vmatprep.subr.bf16.mxu0 0
    %478 = vmatpush1.bf16.xpose.msra.mxu0 0
    %479 = vmatprep.subr.bf16.mxu0 0
    %480 = vmatpush1.bf16.xpose.msra.mxu0 0
    %481 = vmatprep.subr.bf16.mxu0 0
    %482 = vmatpush1.bf16.xpose.msra.mxu0 0
    %483 = vmatprep.subr.bf16.mxu0 0
    %484 = vmatpush1.bf16.xpose.msra.mxu0 0
    %485 = vmatprep.subr.bf16.mxu0 0
    %486 = vmatpush1.bf16.xpose.msra.mxu0 0
    %487 = vmatprep.subr.bf16.mxu0 0
    %488 = vmatpush1.bf16.xpose.msra.mxu0 0
    %489 = vmatprep.subr.bf16.mxu0 0
    %490 = vmatpush1.bf16.xpose.msra.mxu0 0
    %491 = vmatprep.subr.bf16.mxu0 0
    %492 = vmatpush1.bf16.xpose.msra.mxu0 0
    %493 = vmatprep.mubr.bf16.mxu0 0
    %494 = vmatmul.mubr.bf16.gmra.mrb[0].mxu0 %v456
    %v495 = vpop.f32.mrb[0].mxu0
    %v496 = vadd.f32 %v453, %v495
    %v497 = vpop.f32.mrb[0].mxu0
    %v498 = vpop.f32.mrb[0].mxu0
    %v499 = vadd.f32 %v454, %v498
    %v500 = vpop.f32.mrb[0].mxu0
    %501 = vdwg.mxu0
    %v503 = vsel %vm161, %v443, 0
    %505 = vmatprep.subr.bf16.mxu0 0
    %506 = vmatpush1.bf16.xpose.msra.mxu0 %v459
    %507 = vmatprep.subr.bf16.mxu0 0
    %508 = vmatpush1.bf16.xpose.msra.mxu0 0
    %509 = vmatprep.subr.bf16.mxu0 0
    %510 = vmatpush1.bf16.xpose.msra.mxu0 0
    %511 = vmatprep.subr.bf16.mxu0 0
    %512 = vmatpush1.bf16.xpose.msra.mxu0 0
    %513 = vmatprep.subr.bf16.mxu0 0
    %514 = vmatpush1.bf16.xpose.msra.mxu0 0
    %515 = vmatprep.subr.bf16.mxu0 0
    %516 = vmatpush1.bf16.xpose.msra.mxu0 0
    %517 = vmatprep.subr.bf16.mxu0 0
    %518 = vmatpush1.bf16.xpose.msra.mxu0 0
    %519 = vmatprep.subr.bf16.mxu0 0
    %520 = vmatpush1.bf16.xpose.msra.mxu0 0
    %521 = vmatprep.subr.bf16.mxu0 0
    %522 = vmatpush1.bf16.xpose.msra.mxu0 0
    %523 = vmatprep.subr.bf16.mxu0 0
    %524 = vmatpush1.bf16.xpose.msra.mxu0 0
    %525 = vmatprep.subr.bf16.mxu0 0
    %526 = vmatpush1.bf16.xpose.msra.mxu0 0
    %527 = vmatprep.subr.bf16.mxu0 0
    %528 = vmatpush1.bf16.xpose.msra.mxu0 0
    %529 = vmatprep.subr.bf16.mxu0 0
    %530 = vmatpush1.bf16.xpose.msra.mxu0 0
    %531 = vmatprep.subr.bf16.mxu0 0
    %532 = vmatpush1.bf16.xpose.msra.mxu0 0
    %533 = vmatprep.subr.bf16.mxu0 0
    %534 = vmatpush1.bf16.xpose.msra.mxu0 0
    %535 = vmatprep.subr.bf16.mxu0 0
    %536 = vmatpush1.bf16.xpose.msra.mxu0 0
    %537 = vmatprep.mubr.bf16.mxu0 0
    %538 = vmatmul.mubr.bf16.gmra.mrb[0].mxu0 %v503
    %v539 = vpop.f32.mrb[0].mxu0
    %v540 = vadd.f32 %v453, %v539
    %v541 = vpop.f32.mrb[0].mxu0
    %v542 = vpop.f32.mrb[0].mxu0
    %v543 = vadd.f32 %v454, %v542
    %v544 = vpop.f32.mrb[0].mxu0
    %545 = vdwg.mxu0
    %v547 = vsel %vm161, %v444, 0
    %549 = vmatprep.subr.bf16.mxu0 0
    %550 = vmatpush1.bf16.xpose.msra.mxu0 %v459
    %551 = vmatprep.subr.bf16.mxu0 0
    %552 = vmatpush1.bf16.xpose.msra.mxu0 0
    %553 = vmatprep.subr.bf16.mxu0 0
    %554 = vmatpush1.bf16.xpose.msra.mxu0 0
    %555 = vmatprep.subr.bf16.mxu0 0
    %556 = vmatpush1.bf16.xpose.msra.mxu0 0
    %557 = vmatprep.subr.bf16.mxu0 0
    %558 = vmatpush1.bf16.xpose.msra.mxu0 0
    %559 = vmatprep.subr.bf16.mxu0 0
    %560 = vmatpush1.bf16.xpose.msra.mxu0 0
    %561 = vmatprep.subr.bf16.mxu0 0
    %562 = vmatpush1.bf16.xpose.msra.mxu0 0
    %563 = vmatprep.subr.bf16.mxu0 0
    %564 = vmatpush1.bf16.xpose.msra.mxu0 0
    %565 = vmatprep.subr.bf16.mxu0 0
    %566 = vmatpush1.bf16.xpose.msra.mxu0 0
    %567 = vmatprep.subr.bf16.mxu0 0
    %568 = vmatpush1.bf16.xpose.msra.mxu0 0
    %569 = vmatprep.subr.bf16.mxu0 0
    %570 = vmatpush1.bf16.xpose.msra.mxu0 0
    %571 = vmatprep.subr.bf16.mxu0 0
    %572 = vmatpush1.bf16.xpose.msra.mxu0 0
    %573 = vmatprep.subr.bf16.mxu0 0
    %574 = vmatpush1.bf16.xpose.msra.mxu0 0
    %575 = vmatprep.subr.bf16.mxu0 0
    %576 = vmatpush1.bf16.xpose.msra.mxu0 0
    %577 = vmatprep.subr.bf16.mxu0 0
    %578 = vmatpush1.bf16.xpose.msra.mxu0 0
    %579 = vmatprep.subr.bf16.mxu0 0
    %580 = vmatpush1.bf16.xpose.msra.mxu0 0
    %581 = vmatprep.mubr.bf16.mxu0 0
    %582 = vmatmul.mubr.bf16.gmra.mrb[0].mxu0 %v547
    %v583 = vpop.f32.mrb[0].mxu0
    %v584 = vadd.f32 %v453, %v583
    %v585 = vpop.f32.mrb[0].mxu0
    %v586 = vpop.f32.mrb[0].mxu0
    %v587 = vadd.f32 %v454, %v586
    %v588 = vpop.f32.mrb[0].mxu0
    %589 = vdwg.mxu0
    %v591 = vsel %vm161, %v445, 0
    %593 = vmatprep.subr.bf16.mxu0 0
    %594 = vmatpush1.bf16.xpose.msra.mxu0 %v459
    %595 = vmatprep.subr.bf16.mxu0 0
    %596 = vmatpush1.bf16.xpose.msra.mxu0 0
    %597 = vmatprep.subr.bf16.mxu0 0
    %598 = vmatpush1.bf16.xpose.msra.mxu0 0
    %599 = vmatprep.subr.bf16.mxu0 0
    %600 = vmatpush1.bf16.xpose.msra.mxu0 0
    %601 = vmatprep.subr.bf16.mxu0 0
    %602 = vmatpush1.bf16.xpose.msra.mxu0 0
    %603 = vmatprep.subr.bf16.mxu0 0
    %604 = vmatpush1.bf16.xpose.msra.mxu0 0
    %605 = vmatprep.subr.bf16.mxu0 0
    %606 = vmatpush1.bf16.xpose.msra.mxu0 0
    %607 = vmatprep.subr.bf16.mxu0 0
    %608 = vmatpush1.bf16.xpose.msra.mxu0 0
    %609 = vmatprep.subr.bf16.mxu0 0
    %610 = vmatpush1.bf16.xpose.msra.mxu0 0
    %611 = vmatprep.subr.bf16.mxu0 0
    %612 = vmatpush1.bf16.xpose.msra.mxu0 0
    %613 = vmatprep.subr.bf16.mxu0 0
    %614 = vmatpush1.bf16.xpose.msra.mxu0 0
    %615 = vmatprep.subr.bf16.mxu0 0
    %616 = vmatpush1.bf16.xpose.msra.mxu0 0
    %617 = vmatprep.subr.bf16.mxu0 0
    %618 = vmatpush1.bf16.xpose.msra.mxu0 0
    %619 = vmatprep.subr.bf16.mxu0 0
    %620 = vmatpush1.bf16.xpose.msra.mxu0 0
    %621 = vmatprep.subr.bf16.mxu0 0
    %622 = vmatpush1.bf16.xpose.msra.mxu0 0
    %623 = vmatprep.subr.bf16.mxu0 0
    %624 = vmatpush1.bf16.xpose.msra.mxu0 0
    %625 = vmatprep.mubr.bf16.mxu0 0
    %626 = vmatmul.mubr.bf16.gmra.mrb[0].mxu0 %v591
    %v627 = vpop.f32.mrb[0].mxu0
    %v628 = vadd.f32 %v453, %v627
    %v629 = vpop.f32.mrb[0].mxu0
    %v630 = vpop.f32.mrb[0].mxu0
    %v631 = vadd.f32 %v454, %v630
    %v632 = vpop.f32.mrb[0].mxu0
    %633 = vdwg.mxu0
    %v635 = vsel %vm161, %v446, 0
    %637 = vmatprep.subr.bf16.mxu0 0
    %638 = vmatpush1.bf16.xpose.msra.mxu0 %v459
    %639 = vmatprep.subr.bf16.mxu0 0
    %640 = vmatpush1.bf16.xpose.msra.mxu0 0
    %641 = vmatprep.subr.bf16.mxu0 0
    %642 = vmatpush1.bf16.xpose.msra.mxu0 0
    %643 = vmatprep.subr.bf16.mxu0 0
    %644 = vmatpush1.bf16.xpose.msra.mxu0 0
    %645 = vmatprep.subr.bf16.mxu0 0
    %646 = vmatpush1.bf16.xpose.msra.mxu0 0
    %647 = vmatprep.subr.bf16.mxu0 0
    %648 = vmatpush1.bf16.xpose.msra.mxu0 0
    %649 = vmatprep.subr.bf16.mxu0 0
    %650 = vmatpush1.bf16.xpose.msra.mxu0 0
    %651 = vmatprep.subr.bf16.mxu0 0
    %652 = vmatpush1.bf16.xpose.msra.mxu0 0
    %653 = vmatprep.subr.bf16.mxu0 0
    %654 = vmatpush1.bf16.xpose.msra.mxu0 0
    %655 = vmatprep.subr.bf16.mxu0 0
    %656 = vmatpush1.bf16.xpose.msra.mxu0 0
    %657 = vmatprep.subr.bf16.mxu0 0
    %658 = vmatpush1.bf16.xpose.msra.mxu0 0
    %659 = vmatprep.subr.bf16.mxu0 0
    %660 = vmatpush1.bf16.xpose.msra.mxu0 0
    %661 = vmatprep.subr.bf16.mxu0 0
    %662 = vmatpush1.bf16.xpose.msra.mxu0 0
    %663 = vmatprep.subr.bf16.mxu0 0
    %664 = vmatpush1.bf16.xpose.msra.mxu0 0
    %665 = vmatprep.subr.bf16.mxu0 0
    %666 = vmatpush1.bf16.xpose.msra.mxu0 0
    %667 = vmatprep.subr.bf16.mxu0 0
    %668 = vmatpush1.bf16.xpose.msra.mxu0 0
    %669 = vmatprep.mubr.bf16.mxu0 0
    %670 = vmatmul.mubr.bf16.gmra.mrb[0].mxu0 %v635
    %v671 = vpop.f32.mrb[0].mxu0
    %v672 = vadd.f32 %v453, %v671
    %v673 = vpop.f32.mrb[0].mxu0
    %v674 = vpop.f32.mrb[0].mxu0
    %v675 = vadd.f32 %v454, %v674
    %v676 = vpop.f32.mrb[0].mxu0
    %677 = vdwg.mxu0
    %v679 = vsel %vm161, %v447, 0
    %681 = vmatprep.subr.bf16.mxu0 0
    %682 = vmatpush1.bf16.xpose.msra.mxu0 %v459
    %683 = vmatprep.subr.bf16.mxu0 0
    %684 = vmatpush1.bf16.xpose.msra.mxu0 0
    %685 = vmatprep.subr.bf16.mxu0 0
    %686 = vmatpush1.bf16.xpose.msra.mxu0 0
    %687 = vmatprep.subr.bf16.mxu0 0
    %688 = vmatpush1.bf16.xpose.msra.mxu0 0
    %689 = vmatprep.subr.bf16.mxu0 0
    %690 = vmatpush1.bf16.xpose.msra.mxu0 0
    %691 = vmatprep.subr.bf16.mxu0 0
    %692 = vmatpush1.bf16.xpose.msra.mxu0 0
    %693 = vmatprep.subr.bf16.mxu0 0
    %694 = vmatpush1.bf16.xpose.msra.mxu0 0
    %695 = vmatprep.subr.bf16.mxu0 0
    %696 = vmatpush1.bf16.xpose.msra.mxu0 0
    %697 = vmatprep.subr.bf16.mxu0 0
    %698 = vmatpush1.bf16.xpose.msra.mxu0 0
    %699 = vmatprep.subr.bf16.mxu0 0
    %700 = vmatpush1.bf16.xpose.msra.mxu0 0
    %701 = vmatprep.subr.bf16.mxu0 0
    %702 = vmatpush1.bf16.xpose.msra.mxu0 0
    %703 = vmatprep.subr.bf16.mxu0 0
    %704 = vmatpush1.bf16.xpose.msra.mxu0 0
    %705 = vmatprep.subr.bf16.mxu0 0
    %706 = vmatpush1.bf16.xpose.msra.mxu0 0
    %707 = vmatprep.subr.bf16.mxu0 0
    %708 = vmatpush1.bf16.xpose.msra.mxu0 0
    %709 = vmatprep.subr.bf16.mxu0 0
    %710 = vmatpush1.bf16.xpose.msra.mxu0 0
    %711 = vmatprep.subr.bf16.mxu0 0
    %712 = vmatpush1.bf16.xpose.msra.mxu0 0
    %713 = vmatprep.mubr.bf16.mxu0 0
    %714 = vmatmul.mubr.bf16.gmra.mrb[0].mxu0 %v679
    %v715 = vpop.f32.mrb[0].mxu0
    %v716 = vadd.f32 %v453, %v715
    %v717 = vpop.f32.mrb[0].mxu0
    %v718 = vpop.f32.mrb[0].mxu0
    %v719 = vadd.f32 %v454, %v718
    %v720 = vpop.f32.mrb[0].mxu0
    %721 = vdwg.mxu0
    %v723 = vsel %vm161, %v448, 0
    %725 = vmatprep.subr.bf16.mxu0 0
    %726 = vmatpush1.bf16.xpose.msra.mxu0 %v459
    %727 = vmatprep.subr.bf16.mxu0 0
    %728 = vmatpush1.bf16.xpose.msra.mxu0 0
    %729 = vmatprep.subr.bf16.mxu0 0
    %730 = vmatpush1.bf16.xpose.msra.mxu0 0
    %731 = vmatprep.subr.bf16.mxu0 0
    %732 = vmatpush1.bf16.xpose.msra.mxu0 0
    %733 = vmatprep.subr.bf16.mxu0 0
    %734 = vmatpush1.bf16.xpose.msra.mxu0 0
    %735 = vmatprep.subr.bf16.mxu0 0
    %736 = vmatpush1.bf16.xpose.msra.mxu0 0
    %737 = vmatprep.subr.bf16.mxu0 0
    %738 = vmatpush1.bf16.xpose.msra.mxu0 0
    %739 = vmatprep.subr.bf16.mxu0 0
    %740 = vmatpush1.bf16.xpose.msra.mxu0 0
    %741 = vmatprep.subr.bf16.mxu0 0
    %742 = vmatpush1.bf16.xpose.msra.mxu0 0
    %743 = vmatprep.subr.bf16.mxu0 0
    %744 = vmatpush1.bf16.xpose.msra.mxu0 0
    %745 = vmatprep.subr.bf16.mxu0 0
    %746 = vmatpush1.bf16.xpose.msra.mxu0 0
    %747 = vmatprep.subr.bf16.mxu0 0
    %748 = vmatpush1.bf16.xpose.msra.mxu0 0
    %749 = vmatprep.subr.bf16.mxu0 0
    %750 = vmatpush1.bf16.xpose.msra.mxu0 0
    %751 = vmatprep.subr.bf16.mxu0 0
    %752 = vmatpush1.bf16.xpose.msra.mxu0 0
    %753 = vmatprep.subr.bf16.mxu0 0
    %754 = vmatpush1.bf16.xpose.msra.mxu0 0
    %755 = vmatprep.subr.bf16.mxu0 0
    %756 = vmatpush1.bf16.xpose.msra.mxu0 0
    %757 = vmatprep.mubr.bf16.mxu0 0
    %758 = vmatmul.mubr.bf16.gmra.mrb[0].mxu0 %v723
    %v759 = vpop.f32.mrb[0].mxu0
    %v760 = vadd.f32 %v453, %v759
    %v761 = vpop.f32.mrb[0].mxu0
    %v762 = vpop.f32.mrb[0].mxu0
    %v763 = vadd.f32 %v454, %v762
    %v764 = vpop.f32.mrb[0].mxu0
    %765 = vdwg.mxu0
    %v767 = vsel %vm161, %v449, 0
    %769 = vmatprep.subr.bf16.mxu0 0
    %770 = vmatpush1.bf16.xpose.msra.mxu0 %v459
    %771 = vmatprep.subr.bf16.mxu0 0
    %772 = vmatpush1.bf16.xpose.msra.mxu0 0
    %773 = vmatprep.subr.bf16.mxu0 0
    %774 = vmatpush1.bf16.xpose.msra.mxu0 0
    %775 = vmatprep.subr.bf16.mxu0 0
    %776 = vmatpush1.bf16.xpose.msra.mxu0 0
    %777 = vmatprep.subr.bf16.mxu0 0
    %778 = vmatpush1.bf16.xpose.msra.mxu0 0
    %779 = vmatprep.subr.bf16.mxu0 0
    %780 = vmatpush1.bf16.xpose.msra.mxu0 0
    %781 = vmatprep.subr.bf16.mxu0 0
    %782 = vmatpush1.bf16.xpose.msra.mxu0 0
    %783 = vmatprep.subr.bf16.mxu0 0
    %784 = vmatpush1.bf16.xpose.msra.mxu0 0
    %785 = vmatprep.subr.bf16.mxu0 0
    %786 = vmatpush1.bf16.xpose.msra.mxu0 0
    %787 = vmatprep.subr.bf16.mxu0 0
    %788 = vmatpush1.bf16.xpose.msra.mxu0 0
    %789 = vmatprep.subr.bf16.mxu0 0
    %790 = vmatpush1.bf16.xpose.msra.mxu0 0
    %791 = vmatprep.subr.bf16.mxu0 0
    %792 = vmatpush1.bf16.xpose.msra.mxu0 0
    %793 = vmatprep.subr.bf16.mxu0 0
    %794 = vmatpush1.bf16.xpose.msra.mxu0 0
    %795 = vmatprep.subr.bf16.mxu0 0
    %796 = vmatpush1.bf16.xpose.msra.mxu0 0
    %797 = vmatprep.subr.bf16.mxu0 0
    %798 = vmatpush1.bf16.xpose.msra.mxu0 0
    %799 = vmatprep.subr.bf16.mxu0 0
    %800 = vmatpush1.bf16.xpose.msra.mxu0 0
    %801 = vmatprep.mubr.bf16.mxu0 0
    %802 = vmatmul.mubr.bf16.gmra.mrb[0].mxu0 %v767
    %v803 = vpop.f32.mrb[0].mxu0
    %v804 = vadd.f32 %v453, %v803
    %v805 = vpop.f32.mrb[0].mxu0
    %v806 = vpop.f32.mrb[0].mxu0
    %v807 = vadd.f32 %v454, %v806
    %v808 = vpop.f32.mrb[0].mxu0
    %809 = vdwg.mxu0
    %v811 = vsel %vm161, %v450, 0
    %813 = vmatprep.subr.bf16.mxu0 0
    %814 = vmatpush1.bf16.xpose.msra.mxu0 %v459
    %815 = vmatprep.subr.bf16.mxu0 0
    %816 = vmatpush1.bf16.xpose.msra.mxu0 0
    %817 = vmatprep.subr.bf16.mxu0 0
    %818 = vmatpush1.bf16.xpose.msra.mxu0 0
    %819 = vmatprep.subr.bf16.mxu0 0
    %820 = vmatpush1.bf16.xpose.msra.mxu0 0
    %821 = vmatprep.subr.bf16.mxu0 0
    %822 = vmatpush1.bf16.xpose.msra.mxu0 0
    %823 = vmatprep.subr.bf16.mxu0 0
    %824 = vmatpush1.bf16.xpose.msra.mxu0 0
    %825 = vmatprep.subr.bf16.mxu0 0
    %826 = vmatpush1.bf16.xpose.msra.mxu0 0
    %827 = vmatprep.subr.bf16.mxu0 0
    %828 = vmatpush1.bf16.xpose.msra.mxu0 0
    %829 = vmatprep.subr.bf16.mxu0 0
    %830 = vmatpush1.bf16.xpose.msra.mxu0 0
    %831 = vmatprep.subr.bf16.mxu0 0
    %832 = vmatpush1.bf16.xpose.msra.mxu0 0
    %833 = vmatprep.subr.bf16.mxu0 0
    %834 = vmatpush1.bf16.xpose.msra.mxu0 0
    %835 = vmatprep.subr.bf16.mxu0 0
    %836 = vmatpush1.bf16.xpose.msra.mxu0 0
    %837 = vmatprep.subr.bf16.mxu0 0
    %838 = vmatpush1.bf16.xpose.msra.mxu0 0
    %839 = vmatprep.subr.bf16.mxu0 0
    %840 = vmatpush1.bf16.xpose.msra.mxu0 0
    %841 = vmatprep.subr.bf16.mxu0 0
    %842 = vmatpush1.bf16.xpose.msra.mxu0 0
    %843 = vmatprep.subr.bf16.mxu0 0
    %844 = vmatpush1.bf16.xpose.msra.mxu0 0
    %845 = vmatprep.mubr.bf16.mxu0 0
    %846 = vmatmul.mubr.bf16.gmra.mrb[0].mxu0 %v811
    %v847 = vpop.f32.mrb[0].mxu0
    %v848 = vadd.f32 %v453, %v847
    %v849 = vpop.f32.mrb[0].mxu0
    %v850 = vpop.f32.mrb[0].mxu0
    %v851 = vadd.f32 %v454, %v850
    %v852 = vpop.f32.mrb[0].mxu0
    %853 = vdwg.mxu0
    %v855 = vsel %vm161, %v451, 0
    %857 = vmatprep.subr.bf16.mxu0 0
    %858 = vmatpush1.bf16.xpose.msra.mxu0 %v459
    %859 = vmatprep.subr.bf16.mxu0 0
    %860 = vmatpush1.bf16.xpose.msra.mxu0 0
    %861 = vmatprep.subr.bf16.mxu0 0
    %862 = vmatpush1.bf16.xpose.msra.mxu0 0
    %863 = vmatprep.subr.bf16.mxu0 0
    %864 = vmatpush1.bf16.xpose.msra.mxu0 0
    %865 = vmatprep.subr.bf16.mxu0 0
    %866 = vmatpush1.bf16.xpose.msra.mxu0 0
    %867 = vmatprep.subr.bf16.mxu0 0
    %868 = vmatpush1.bf16.xpose.msra.mxu0 0
    %869 = vmatprep.subr.bf16.mxu0 0
    %870 = vmatpush1.bf16.xpose.msra.mxu0 0
    %871 = vmatprep.subr.bf16.mxu0 0
    %872 = vmatpush1.bf16.xpose.msra.mxu0 0
    %873 = vmatprep.subr.bf16.mxu0 0
    %874 = vmatpush1.bf16.xpose.msra.mxu0 0
    %875 = vmatprep.subr.bf16.mxu0 0
    %876 = vmatpush1.bf16.xpose.msra.mxu0 0
    %877 = vmatprep.subr.bf16.mxu0 0
    %878 = vmatpush1.bf16.xpose.msra.mxu0 0
    %879 = vmatprep.subr.bf16.mxu0 0
    %880 = vmatpush1.bf16.xpose.msra.mxu0 0
    %881 = vmatprep.subr.bf16.mxu0 0
    %882 = vmatpush1.bf16.xpose.msra.mxu0 0
    %883 = vmatprep.subr.bf16.mxu0 0
    %884 = vmatpush1.bf16.xpose.msra.mxu0 0
    %885 = vmatprep.subr.bf16.mxu0 0
    %886 = vmatpush1.bf16.xpose.msra.mxu0 0
    %887 = vmatprep.subr.bf16.mxu0 0
    %888 = vmatpush1.bf16.xpose.msra.mxu0 0
    %889 = vmatprep.mubr.bf16.mxu0 0
    %890 = vmatmul.mubr.bf16.gmra.mrb[0].mxu0 %v855
    %v891 = vpop.f32.mrb[0].mxu0
    %v892 = vadd.f32 %v453, %v891
    %v893 = vpop.f32.mrb[0].mxu0
    %v894 = vpop.f32.mrb[0].mxu0
    %v895 = vadd.f32 %v454, %v894
    %v896 = vpop.f32.mrb[0].mxu0
    %897 = vdwg.mxu0
    %vm898 = vcmask 130048
    %v899 = vsel %vm898, %v496, -inf
    %900 = vmax.xlane.f32.xlu0 %v899
    %v901 = vpop.xlane.xlu0 %900
    %v902 = vsel %vm898, %v499, -inf
    %903 = vmax.xlane.f32.xlu0 %v902
    %v904 = vpop.xlane.xlu0 %903
    %v905 = vsel %vm898, %v540, -inf
    %906 = vmax.xlane.f32.xlu0 %v905
    %v907 = vpop.xlane.xlu0 %906
    %v908 = vsel %vm898, %v543, -inf
    %909 = vmax.xlane.f32.xlu0 %v908
    %v910 = vpop.xlane.xlu0 %909
    %v911 = vsel %vm898, %v584, -inf
    %912 = vmax.xlane.f32.xlu0 %v911
    %v913 = vpop.xlane.xlu0 %912
    %v914 = vsel %vm898, %v587, -inf
    %915 = vmax.xlane.f32.xlu0 %v914
    %v916 = vpop.xlane.xlu0 %915
    %v917 = vsel %vm898, %v628, -inf
    %918 = vmax.xlane.f32.xlu0 %v917
    %v919 = vpop.xlane.xlu0 %918
    %v920 = vsel %vm898, %v631, -inf
    %921 = vmax.xlane.f32.xlu0 %v920
    %v922 = vpop.xlane.xlu0 %921
    %v923 = vsel %vm898, %v672, -inf
    %924 = vmax.xlane.f32.xlu0 %v923
    %v925 = vpop.xlane.xlu0 %924
    %v926 = vsel %vm898, %v675, -inf
    %927 = vmax.xlane.f32.xlu0 %v926
    %v928 = vpop.xlane.xlu0 %927
    %v929 = vsel %vm898, %v716, -inf
    %930 = vmax.xlane.f32.xlu0 %v929
    %v931 = vpop.xlane.xlu0 %930
    %v932 = vsel %vm898, %v719, -inf
    %933 = vmax.xlane.f32.xlu0 %v932
    %v934 = vpop.xlane.xlu0 %933
    %v935 = vsel %vm898, %v760, -inf
    %936 = vmax.xlane.f32.xlu0 %v935
    %v937 = vpop.xlane.xlu0 %936
    %v938 = vsel %vm898, %v763, -inf
    %939 = vmax.xlane.f32.xlu0 %v938
    %v940 = vpop.xlane.xlu0 %939
    %v941 = vsel %vm898, %v804, -inf
    %942 = vmax.xlane.f32.xlu0 %v941
    %v943 = vpop.xlane.xlu0 %942
    %v944 = vsel %vm898, %v807, -inf
    %945 = vmax.xlane.f32.xlu0 %v944
    %v946 = vpop.xlane.xlu0 %945
    %v947 = vsel %vm898, %v848, -inf
    %948 = vmax.xlane.f32.xlu0 %v947
    %v949 = vpop.xlane.xlu0 %948
    %v950 = vsel %vm898, %v851, -inf
    %951 = vmax.xlane.f32.xlu0 %v950
    %v952 = vpop.xlane.xlu0 %951
    %v953 = vsel %vm898, %v892, -inf
    %954 = vmax.xlane.f32.xlu0 %v953
    %v955 = vpop.xlane.xlu0 %954
    %v956 = vsel %vm898, %v895, -inf
    %957 = vmax.xlane.f32.xlu0 %v956
    %v958 = vpop.xlane.xlu0 %957
    %v959 = vsub.f32 %v496, %v901
    %v960 = vsub.f32 %v499, %v904
    %v961 = vsub.f32 %v540, %v907
    %v962 = vsub.f32 %v543, %v910
    %v963 = vsub.f32 %v584, %v913
    %v964 = vsub.f32 %v587, %v916
    %v965 = vsub.f32 %v628, %v919
    %v966 = vsub.f32 %v631, %v922
    %v967 = vsub.f32 %v672, %v925
    %v968 = vsub.f32 %v675, %v928
    %v969 = vsub.f32 %v716, %v931
    %v970 = vsub.f32 %v719, %v934
    %v971 = vsub.f32 %v760, %v937
    %v972 = vsub.f32 %v763, %v940
    %v973 = vsub.f32 %v804, %v943
    %v974 = vsub.f32 %v807, %v946
    %v975 = vsub.f32 %v848, %v949
    %v976 = vsub.f32 %v851, %v952
    %v977 = vsub.f32 %v892, %v955
    %v978 = vsub.f32 %v895, %v958
    %v979 = vmul.f32 %v959, 1.442695
    %v980 = vpow.pop %v979
    %v981 = vmul.f32 %v960, 1.442695
    %v982 = vpow.pop %v981
    %v983 = vmul.f32 %v961, 1.442695
    %v984 = vpow.pop %v983
    %v985 = vmul.f32 %v962, 1.442695
    %v986 = vpow.pop %v985
    %v987 = vmul.f32 %v963, 1.442695
    %v988 = vpow.pop %v987
    %v989 = vmul.f32 %v964, 1.442695
    %v990 = vpow.pop %v989
    %v991 = vmul.f32 %v965, 1.442695
    %v992 = vpow.pop %v991
    %v993 = vmul.f32 %v966, 1.442695
    %v994 = vpow.pop %v993
    %v995 = vmul.f32 %v967, 1.442695
    %v996 = vpow.pop %v995
    %v997 = vmul.f32 %v968, 1.442695
    %v998 = vpow.pop %v997
    %v999 = vmul.f32 %v969, 1.442695
    %v1000 = vpow.pop %v999
    %v1001 = vmul.f32 %v970, 1.442695
    %v1002 = vpow.pop %v1001
    %v1003 = vmul.f32 %v971, 1.442695
    %v1004 = vpow.pop %v1003
    %v1005 = vmul.f32 %v972, 1.442695
    %v1006 = vpow.pop %v1005
    %v1007 = vmul.f32 %v973, 1.442695
    %v1008 = vpow.pop %v1007
    %v1009 = vmul.f32 %v974, 1.442695
    %v1010 = vpow.pop %v1009
    %v1011 = vmul.f32 %v975, 1.442695
    %v1012 = vpow.pop %v1011
    %v1013 = vmul.f32 %v976, 1.442695
    %v1014 = vpow.pop %v1013
    %v1015 = vmul.f32 %v977, 1.442695
    %v1016 = vpow.pop %v1015
    %v1017 = vmul.f32 %v978, 1.442695
    %v1018 = vpow.pop %v1017
    %v1019 = vsel %vm898, %v980, 0.0
    %1020 = vadd.xlane.f32.xlu0 %v1019
    %v1021 = vpop.xlane.xlu0 %1020
    %v1022 = vsel %vm898, %v982, 0.0
    %1023 = vadd.xlane.f32.xlu0 %v1022
    %v1024 = vpop.xlane.xlu0 %1023
    %v1025 = vsel %vm898, %v984, 0.0
    %1026 = vadd.xlane.f32.xlu0 %v1025
    %v1027 = vpop.xlane.xlu0 %1026
    %v1028 = vsel %vm898, %v986, 0.0
    %1029 = vadd.xlane.f32.xlu0 %v1028
    %v1030 = vpop.xlane.xlu0 %1029
    %v1031 = vsel %vm898, %v988, 0.0
    %1032 = vadd.xlane.f32.xlu0 %v1031
    %v1033 = vpop.xlane.xlu0 %1032
    %v1034 = vsel %vm898, %v990, 0.0
    %1035 = vadd.xlane.f32.xlu0 %v1034
    %v1036 = vpop.xlane.xlu0 %1035
    %v1037 = vsel %vm898, %v992, 0.0
    %1038 = vadd.xlane.f32.xlu0 %v1037
    %v1039 = vpop.xlane.xlu0 %1038
    %v1040 = vsel %vm898, %v994, 0.0
    %1041 = vadd.xlane.f32.xlu0 %v1040
    %v1042 = vpop.xlane.xlu0 %1041
    %v1043 = vsel %vm898, %v996, 0.0
    %1044 = vadd.xlane.f32.xlu0 %v1043
    %v1045 = vpop.xlane.xlu0 %1044
    %v1046 = vsel %vm898, %v998, 0.0
    %1047 = vadd.xlane.f32.xlu0 %v1046
    %v1048 = vpop.xlane.xlu0 %1047
    %v1049 = vsel %vm898, %v1000, 0.0
    %1050 = vadd.xlane.f32.xlu0 %v1049
    %v1051 = vpop.xlane.xlu0 %1050
    %v1052 = vsel %vm898, %v1002, 0.0
    %1053 = vadd.xlane.f32.xlu0 %v1052
    %v1054 = vpop.xlane.xlu0 %1053
    %v1055 = vsel %vm898, %v1004, 0.0
    %1056 = vadd.xlane.f32.xlu0 %v1055
    %v1057 = vpop.xlane.xlu0 %1056
    %v1058 = vsel %vm898, %v1006, 0.0
    %1059 = vadd.xlane.f32.xlu0 %v1058
    %v1060 = vpop.xlane.xlu0 %1059
    %v1061 = vsel %vm898, %v1008, 0.0
    %1062 = vadd.xlane.f32.xlu0 %v1061
    %v1063 = vpop.xlane.xlu0 %1062
    %v1064 = vsel %vm898, %v1010, 0.0
    %1065 = vadd.xlane.f32.xlu0 %v1064
    %v1066 = vpop.xlane.xlu0 %1065
    %v1067 = vsel %vm898, %v1012, 0.0
    %1068 = vadd.xlane.f32.xlu0 %v1067
    %v1069 = vpop.xlane.xlu0 %1068
    %v1070 = vsel %vm898, %v1014, 0.0
    %1071 = vadd.xlane.f32.xlu0 %v1070
    %v1072 = vpop.xlane.xlu0 %1071
    %v1073 = vsel %vm898, %v1016, 0.0
    %1074 = vadd.xlane.f32.xlu0 %v1073
    %v1075 = vpop.xlane.xlu0 %1074
    %v1076 = vsel %vm898, %v1018, 0.0
    %1077 = vadd.xlane.f32.xlu0 %v1076
    %v1078 = vpop.xlane.xlu0 %1077
    %v1079 = vrcp.pop %v1021
    %v1080 = vmul.f32 %v980, %v1079
    %v1081 = vrcp.pop %v1024
    %v1082 = vmul.f32 %v982, %v1081
    %v1083 = vrcp.pop %v1027
    %v1084 = vmul.f32 %v984, %v1083
    %v1085 = vrcp.pop %v1030
    %v1086 = vmul.f32 %v986, %v1085
    %v1087 = vrcp.pop %v1033
    %v1088 = vmul.f32 %v988, %v1087
    %v1089 = vrcp.pop %v1036
    %v1090 = vmul.f32 %v990, %v1089
    %v1091 = vrcp.pop %v1039
    %v1092 = vmul.f32 %v992, %v1091
    %v1093 = vrcp.pop %v1042
    %v1094 = vmul.f32 %v994, %v1093
    %v1095 = vrcp.pop %v1045
    %v1096 = vmul.f32 %v996, %v1095
    %v1097 = vrcp.pop %v1048
    %v1098 = vmul.f32 %v998, %v1097
    %v1099 = vrcp.pop %v1051
    %v1100 = vmul.f32 %v1000, %v1099
    %v1101 = vrcp.pop %v1054
    %v1102 = vmul.f32 %v1002, %v1101
    %v1103 = vrcp.pop %v1057
    %v1104 = vmul.f32 %v1004, %v1103
    %v1105 = vrcp.pop %v1060
    %v1106 = vmul.f32 %v1006, %v1105
    %v1107 = vrcp.pop %v1063
    %v1108 = vmul.f32 %v1008, %v1107
    %v1109 = vrcp.pop %v1066
    %v1110 = vmul.f32 %v1010, %v1109
    %v1111 = vrcp.pop %v1069
    %v1112 = vmul.f32 %v1012, %v1111
    %v1113 = vrcp.pop %v1072
    %v1114 = vmul.f32 %v1014, %v1113
    %v1115 = vrcp.pop %v1075
    %v1116 = vmul.f32 %v1016, %v1115
    %v1117 = vrcp.pop %v1078
    %v1118 = vmul.f32 %v1018, %v1117
    %v1119 = vmul.f32 %v346, %v375
    %v1120 = vmul.f32 %v349, %v375
    %v1121 = vmul.f32 %v346, %v379
    %v1122 = vmul.f32 %v349, %v379
    %v1123 = vmul.f32 %v346, %v383
    %v1124 = vmul.f32 %v349, %v383
    %v1125 = vmul.f32 %v346, %v387
    %v1126 = vmul.f32 %v349, %v387
    %v1127 = vmul.f32 %v346, %v391
    %v1128 = vmul.f32 %v349, %v391
    %v1129 = vmul.f32 %v346, %v395
    %v1130 = vmul.f32 %v349, %v395
    %v1131 = vmul.f32 %v346, %v399
    %v1132 = vmul.f32 %v349, %v399
    %v1133 = vmul.f32 %v346, %v403
    %v1134 = vmul.f32 %v349, %v403
    %v1135 = vmul.f32 %v346, %v407
    %v1136 = vmul.f32 %v349, %v407
    %v1137 = vmul.f32 %v346, %v411
    %v1138 = vmul.f32 %v349, %v411
    %v1139 = vpack.c.bf16 %v1120, %v1119
    %v1140 = vpack.c.bf16 %v1122, %v1121
    %v1141 = vpack.c.bf16 %v1124, %v1123
    %v1142 = vpack.c.bf16 %v1126, %v1125
    %v1143 = vpack.c.bf16 %v1128, %v1127
    %v1144 = vpack.c.bf16 %v1130, %v1129
    %v1145 = vpack.c.bf16 %v1132, %v1131
    %v1146 = vpack.c.bf16 %v1134, %v1133
    %v1147 = vpack.c.bf16 %v1136, %v1135
    %v1148 = vpack.c.bf16 %v1138, %v1137
    %v1149 = vpack.c.bf16 %v1082, %v1080
    %v1150 = vpack.c.bf16 %v1086, %v1084
    %v1151 = vpack.c.bf16 %v1090, %v1088
    %v1152 = vpack.c.bf16 %v1094, %v1092
    %v1153 = vpack.c.bf16 %v1098, %v1096
    %v1154 = vpack.c.bf16 %v1102, %v1100
    %v1155 = vpack.c.bf16 %v1106, %v1104
    %v1156 = vpack.c.bf16 %v1110, %v1108
    %v1157 = vpack.c.bf16 %v1114, %v1112
    %v1158 = vpack.c.bf16 %v1118, %v1116
    %v1160 = vsel %vm898, %v1149, 0
    %1162 = vmatprep.subr.bf16.mxu0 0
    %1163 = vmatpush1.bf16.msra.mxu0 %v1139
    %1164 = vmatprep.subr.bf16.mxu0 0
    %1165 = vmatpush1.bf16.msra.mxu0 0
    %1166 = vmatprep.subr.bf16.mxu0 0
    %1167 = vmatpush1.bf16.msra.mxu0 0
    %1168 = vmatprep.subr.bf16.mxu0 0
    %1169 = vmatpush1.bf16.msra.mxu0 0
    %1170 = vmatprep.subr.bf16.mxu0 0
    %1171 = vmatpush1.bf16.msra.mxu0 0
    %1172 = vmatprep.subr.bf16.mxu0 0
    %1173 = vmatpush1.bf16.msra.mxu0 0
    %1174 = vmatprep.subr.bf16.mxu0 0
    %1175 = vmatpush1.bf16.msra.mxu0 0
    %1176 = vmatprep.subr.bf16.mxu0 0
    %1177 = vmatpush1.bf16.msra.mxu0 0
    %1178 = vmatprep.subr.bf16.mxu0 0
    %1179 = vmatpush1.bf16.msra.mxu0 0
    %1180 = vmatprep.subr.bf16.mxu0 0
    %1181 = vmatpush1.bf16.msra.mxu0 0
    %1182 = vmatprep.subr.bf16.mxu0 0
    %1183 = vmatpush1.bf16.msra.mxu0 0
    %1184 = vmatprep.subr.bf16.mxu0 0
    %1185 = vmatpush1.bf16.msra.mxu0 0
    %1186 = vmatprep.subr.bf16.mxu0 0
    %1187 = vmatpush1.bf16.msra.mxu0 0
    %1188 = vmatprep.subr.bf16.mxu0 0
    %1189 = vmatpush1.bf16.msra.mxu0 0
    %1190 = vmatprep.subr.bf16.mxu0 0
    %1191 = vmatpush1.bf16.msra.mxu0 0
    %1192 = vmatprep.subr.bf16.mxu0 0
    %1193 = vmatpush1.bf16.msra.mxu0 0
    %1194 = vmatprep.mubr.bf16.mxu0 0
    %1195 = vmatmul.mubr.bf16.gmra.mrb[0].mxu0 %v1160
    %v1196 = vpop.f32.mrb[0].mxu0
    %v1197 = vadd.f32 0.0, %v1196
    %v1198 = vpop.f32.mrb[0].mxu0
    %v1199 = vpop.f32.mrb[0].mxu0
    %v1200 = vadd.f32 0.0, %v1199
    %v1201 = vpop.f32.mrb[0].mxu0
    %1202 = vdwg.mxu0
    %v1204 = vsel %vm898, %v1150, 0
    %1206 = vmatprep.subr.bf16.mxu0 0
    %1207 = vmatpush1.bf16.msra.mxu0 %v1140
    %1208 = vmatprep.subr.bf16.mxu0 0
    %1209 = vmatpush1.bf16.msra.mxu0 0
    %1210 = vmatprep.subr.bf16.mxu0 0
    %1211 = vmatpush1.bf16.msra.mxu0 0
    %1212 = vmatprep.subr.bf16.mxu0 0
    %1213 = vmatpush1.bf16.msra.mxu0 0
    %1214 = vmatprep.subr.bf16.mxu0 0
    %1215 = vmatpush1.bf16.msra.mxu0 0
    %1216 = vmatprep.subr.bf16.mxu0 0
    %1217 = vmatpush1.bf16.msra.mxu0 0
    %1218 = vmatprep.subr.bf16.mxu0 0
    %1219 = vmatpush1.bf16.msra.mxu0 0
    %1220 = vmatprep.subr.bf16.mxu0 0
    %1221 = vmatpush1.bf16.msra.mxu0 0
    %1222 = vmatprep.subr.bf16.mxu0 0
    %1223 = vmatpush1.bf16.msra.mxu0 0
    %1224 = vmatprep.subr.bf16.mxu0 0
    %1225 = vmatpush1.bf16.msra.mxu0 0
    %1226 = vmatprep.subr.bf16.mxu0 0
    %1227 = vmatpush1.bf16.msra.mxu0 0
    %1228 = vmatprep.subr.bf16.mxu0 0
    %1229 = vmatpush1.bf16.msra.mxu0 0
    %1230 = vmatprep.subr.bf16.mxu0 0
    %1231 = vmatpush1.bf16.msra.mxu0 0
    %1232 = vmatprep.subr.bf16.mxu0 0
    %1233 = vmatpush1.bf16.msra.mxu0 0
    %1234 = vmatprep.subr.bf16.mxu0 0
    %1235 = vmatpush1.bf16.msra.mxu0 0
    %1236 = vmatprep.subr.bf16.mxu0 0
    %1237 = vmatpush1.bf16.msra.mxu0 0
    %1238 = vmatprep.mubr.bf16.mxu0 0
    %1239 = vmatmul.mubr.bf16.gmra.mrb[0].mxu0 %v1204
    %v1240 = vpop.f32.mrb[0].mxu0
    %v1241 = vadd.f32 0.0, %v1240
    %v1242 = vpop.f32.mrb[0].mxu0
    %v1243 = vpop.f32.mrb[0].mxu0
    %v1244 = vadd.f32 0.0, %v1243
    %v1245 = vpop.f32.mrb[0].mxu0
    %1246 = vdwg.mxu0
    %v1248 = vsel %vm898, %v1151, 0
    %1250 = vmatprep.subr.bf16.mxu0 0
    %1251 = vmatpush1.bf16.msra.mxu0 %v1141
    %1252 = vmatprep.subr.bf16.mxu0 0
    %1253 = vmatpush1.bf16.msra.mxu0 0
    %1254 = vmatprep.subr.bf16.mxu0 0
    %1255 = vmatpush1.bf16.msra.mxu0 0
    %1256 = vmatprep.subr.bf16.mxu0 0
    %1257 = vmatpush1.bf16.msra.mxu0 0
    %1258 = vmatprep.subr.bf16.mxu0 0
    %1259 = vmatpush1.bf16.msra.mxu0 0
    %1260 = vmatprep.subr.bf16.mxu0 0
    %1261 = vmatpush1.bf16.msra.mxu0 0
    %1262 = vmatprep.subr.bf16.mxu0 0
    %1263 = vmatpush1.bf16.msra.mxu0 0
    %1264 = vmatprep.subr.bf16.mxu0 0
    %1265 = vmatpush1.bf16.msra.mxu0 0
    %1266 = vmatprep.subr.bf16.mxu0 0
    %1267 = vmatpush1.bf16.msra.mxu0 0
    %1268 = vmatprep.subr.bf16.mxu0 0
    %1269 = vmatpush1.bf16.msra.mxu0 0
    %1270 = vmatprep.subr.bf16.mxu0 0
    %1271 = vmatpush1.bf16.msra.mxu0 0
    %1272 = vmatprep.subr.bf16.mxu0 0
    %1273 = vmatpush1.bf16.msra.mxu0 0
    %1274 = vmatprep.subr.bf16.mxu0 0
    %1275 = vmatpush1.bf16.msra.mxu0 0
    %1276 = vmatprep.subr.bf16.mxu0 0
    %1277 = vmatpush1.bf16.msra.mxu0 0
    %1278 = vmatprep.subr.bf16.mxu0 0
    %1279 = vmatpush1.bf16.msra.mxu0 0
    %1280 = vmatprep.subr.bf16.mxu0 0
    %1281 = vmatpush1.bf16.msra.mxu0 0
    %1282 = vmatprep.mubr.bf16.mxu0 0
    %1283 = vmatmul.mubr.bf16.gmra.mrb[0].mxu0 %v1248
    %v1284 = vpop.f32.mrb[0].mxu0
    %v1285 = vadd.f32 0.0, %v1284
    %v1286 = vpop.f32.mrb[0].mxu0
    %v1287 = vpop.f32.mrb[0].mxu0
    %v1288 = vadd.f32 0.0, %v1287
    %v1289 = vpop.f32.mrb[0].mxu0
    %1290 = vdwg.mxu0
    %v1292 = vsel %vm898, %v1152, 0
    %1294 = vmatprep.subr.bf16.mxu0 0
    %1295 = vmatpush1.bf16.msra.mxu0 %v1142
    %1296 = vmatprep.subr.bf16.mxu0 0
    %1297 = vmatpush1.bf16.msra.mxu0 0
    %1298 = vmatprep.subr.bf16.mxu0 0
    %1299 = vmatpush1.bf16.msra.mxu0 0
    %1300 = vmatprep.subr.bf16.mxu0 0
    %1301 = vmatpush1.bf16.msra.mxu0 0
    %1302 = vmatprep.subr.bf16.mxu0 0
    %1303 = vmatpush1.bf16.msra.mxu0 0
    %1304 = vmatprep.subr.bf16.mxu0 0
    %1305 = vmatpush1.bf16.msra.mxu0 0
    %1306 = vmatprep.subr.bf16.mxu0 0
    %1307 = vmatpush1.bf16.msra.mxu0 0
    %1308 = vmatprep.subr.bf16.mxu0 0
    %1309 = vmatpush1.bf16.msra.mxu0 0
    %1310 = vmatprep.subr.bf16.mxu0 0
    %1311 = vmatpush1.bf16.msra.mxu0 0
    %1312 = vmatprep.subr.bf16.mxu0 0
    %1313 = vmatpush1.bf16.msra.mxu0 0
    %1314 = vmatprep.subr.bf16.mxu0 0
    %1315 = vmatpush1.bf16.msra.mxu0 0
    %1316 = vmatprep.subr.bf16.mxu0 0
    %1317 = vmatpush1.bf16.msra.mxu0 0
    %1318 = vmatprep.subr.bf16.mxu0 0
    %1319 = vmatpush1.bf16.msra.mxu0 0
    %1320 = vmatprep.subr.bf16.mxu0 0
    %1321 = vmatpush1.bf16.msra.mxu0 0
    %1322 = vmatprep.subr.bf16.mxu0 0
    %1323 = vmatpush1.bf16.msra.mxu0 0
    %1324 = vmatprep.subr.bf16.mxu0 0
    %1325 = vmatpush1.bf16.msra.mxu0 0
    %1326 = vmatprep.mubr.bf16.mxu0 0
    %1327 = vmatmul.mubr.bf16.gmra.mrb[0].mxu0 %v1292
    %v1328 = vpop.f32.mrb[0].mxu0
    %v1329 = vadd.f32 0.0, %v1328
    %v1330 = vpop.f32.mrb[0].mxu0
    %v1331 = vpop.f32.mrb[0].mxu0
    %v1332 = vadd.f32 0.0, %v1331
    %v1333 = vpop.f32.mrb[0].mxu0
    %1334 = vdwg.mxu0
    %v1336 = vsel %vm898, %v1153, 0
    %1338 = vmatprep.subr.bf16.mxu0 0
    %1339 = vmatpush1.bf16.msra.mxu0 %v1143
    %1340 = vmatprep.subr.bf16.mxu0 0
    %1341 = vmatpush1.bf16.msra.mxu0 0
    %1342 = vmatprep.subr.bf16.mxu0 0
    %1343 = vmatpush1.bf16.msra.mxu0 0
    %1344 = vmatprep.subr.bf16.mxu0 0
    %1345 = vmatpush1.bf16.msra.mxu0 0
    %1346 = vmatprep.subr.bf16.mxu0 0
    %1347 = vmatpush1.bf16.msra.mxu0 0
    %1348 = vmatprep.subr.bf16.mxu0 0
    %1349 = vmatpush1.bf16.msra.mxu0 0
    %1350 = vmatprep.subr.bf16.mxu0 0
    %1351 = vmatpush1.bf16.msra.mxu0 0
    %1352 = vmatprep.subr.bf16.mxu0 0
    %1353 = vmatpush1.bf16.msra.mxu0 0
    %1354 = vmatprep.subr.bf16.mxu0 0
    %1355 = vmatpush1.bf16.msra.mxu0 0
    %1356 = vmatprep.subr.bf16.mxu0 0
    %1357 = vmatpush1.bf16.msra.mxu0 0
    %1358 = vmatprep.subr.bf16.mxu0 0
    %1359 = vmatpush1.bf16.msra.mxu0 0
    %1360 = vmatprep.subr.bf16.mxu0 0
    %1361 = vmatpush1.bf16.msra.mxu0 0
    %1362 = vmatprep.subr.bf16.mxu0 0
    %1363 = vmatpush1.bf16.msra.mxu0 0
    %1364 = vmatprep.subr.bf16.mxu0 0
    %1365 = vmatpush1.bf16.msra.mxu0 0
    %1366 = vmatprep.subr.bf16.mxu0 0
    %1367 = vmatpush1.bf16.msra.mxu0 0
    %1368 = vmatprep.subr.bf16.mxu0 0
    %1369 = vmatpush1.bf16.msra.mxu0 0
    %1370 = vmatprep.mubr.bf16.mxu0 0
    %1371 = vmatmul.mubr.bf16.gmra.mrb[0].mxu0 %v1336
    %v1372 = vpop.f32.mrb[0].mxu0
    %v1373 = vadd.f32 0.0, %v1372
    %v1374 = vpop.f32.mrb[0].mxu0
    %v1375 = vpop.f32.mrb[0].mxu0
    %v1376 = vadd.f32 0.0, %v1375
    %v1377 = vpop.f32.mrb[0].mxu0
    %1378 = vdwg.mxu0
    %v1380 = vsel %vm898, %v1154, 0
    %1382 = vmatprep.subr.bf16.mxu0 0
    %1383 = vmatpush1.bf16.msra.mxu0 %v1144
    %1384 = vmatprep.subr.bf16.mxu0 0
    %1385 = vmatpush1.bf16.msra.mxu0 0
    %1386 = vmatprep.subr.bf16.mxu0 0
    %1387 = vmatpush1.bf16.msra.mxu0 0
    %1388 = vmatprep.subr.bf16.mxu0 0
    %1389 = vmatpush1.bf16.msra.mxu0 0
    %1390 = vmatprep.subr.bf16.mxu0 0
    %1391 = vmatpush1.bf16.msra.mxu0 0
    %1392 = vmatprep.subr.bf16.mxu0 0
    %1393 = vmatpush1.bf16.msra.mxu0 0
    %1394 = vmatprep.subr.bf16.mxu0 0
    %1395 = vmatpush1.bf16.msra.mxu0 0
    %1396 = vmatprep.subr.bf16.mxu0 0
    %1397 = vmatpush1.bf16.msra.mxu0 0
    %1398 = vmatprep.subr.bf16.mxu0 0
    %1399 = vmatpush1.bf16.msra.mxu0 0
    %1400 = vmatprep.subr.bf16.mxu0 0
    %1401 = vmatpush1.bf16.msra.mxu0 0
    %1402 = vmatprep.subr.bf16.mxu0 0
    %1403 = vmatpush1.bf16.msra.mxu0 0
    %1404 = vmatprep.subr.bf16.mxu0 0
    %1405 = vmatpush1.bf16.msra.mxu0 0
    %1406 = vmatprep.subr.bf16.mxu0 0
    %1407 = vmatpush1.bf16.msra.mxu0 0
    %1408 = vmatprep.subr.bf16.mxu0 0
    %1409 = vmatpush1.bf16.msra.mxu0 0
    %1410 = vmatprep.subr.bf16.mxu0 0
    %1411 = vmatpush1.bf16.msra.mxu0 0
    %1412 = vmatprep.subr.bf16.mxu0 0
    %1413 = vmatpush1.bf16.msra.mxu0 0
    %1414 = vmatprep.mubr.bf16.mxu0 0
    %1415 = vmatmul.mubr.bf16.gmra.mrb[0].mxu0 %v1380
    %v1416 = vpop.f32.mrb[0].mxu0
    %v1417 = vadd.f32 0.0, %v1416
    %v1418 = vpop.f32.mrb[0].mxu0
    %v1419 = vpop.f32.mrb[0].mxu0
    %v1420 = vadd.f32 0.0, %v1419
    %v1421 = vpop.f32.mrb[0].mxu0
    %1422 = vdwg.mxu0
    %v1424 = vsel %vm898, %v1155, 0
    %1426 = vmatprep.subr.bf16.mxu0 0
    %1427 = vmatpush1.bf16.msra.mxu0 %v1145
    %1428 = vmatprep.subr.bf16.mxu0 0
    %1429 = vmatpush1.bf16.msra.mxu0 0
    %1430 = vmatprep.subr.bf16.mxu0 0
    %1431 = vmatpush1.bf16.msra.mxu0 0
    %1432 = vmatprep.subr.bf16.mxu0 0
    %1433 = vmatpush1.bf16.msra.mxu0 0
    %1434 = vmatprep.subr.bf16.mxu0 0
    %1435 = vmatpush1.bf16.msra.mxu0 0
    %1436 = vmatprep.subr.bf16.mxu0 0
    %1437 = vmatpush1.bf16.msra.mxu0 0
    %1438 = vmatprep.subr.bf16.mxu0 0
    %1439 = vmatpush1.bf16.msra.mxu0 0
    %1440 = vmatprep.subr.bf16.mxu0 0
    %1441 = vmatpush1.bf16.msra.mxu0 0
    %1442 = vmatprep.subr.bf16.mxu0 0
    %1443 = vmatpush1.bf16.msra.mxu0 0
    %1444 = vmatprep.subr.bf16.mxu0 0
    %1445 = vmatpush1.bf16.msra.mxu0 0
    %1446 = vmatprep.subr.bf16.mxu0 0
    %1447 = vmatpush1.bf16.msra.mxu0 0
    %1448 = vmatprep.subr.bf16.mxu0 0
    %1449 = vmatpush1.bf16.msra.mxu0 0
    %1450 = vmatprep.subr.bf16.mxu0 0
    %1451 = vmatpush1.bf16.msra.mxu0 0
    %1452 = vmatprep.subr.bf16.mxu0 0
    %1453 = vmatpush1.bf16.msra.mxu0 0
    %1454 = vmatprep.subr.bf16.mxu0 0
    %1455 = vmatpush1.bf16.msra.mxu0 0
    %1456 = vmatprep.subr.bf16.mxu0 0
    %1457 = vmatpush1.bf16.msra.mxu0 0
    %1458 = vmatprep.mubr.bf16.mxu0 0
    %1459 = vmatmul.mubr.bf16.gmra.mrb[0].mxu0 %v1424
    %v1460 = vpop.f32.mrb[0].mxu0
    %v1461 = vadd.f32 0.0, %v1460
    %v1462 = vpop.f32.mrb[0].mxu0
    %v1463 = vpop.f32.mrb[0].mxu0
    %v1464 = vadd.f32 0.0, %v1463
    %v1465 = vpop.f32.mrb[0].mxu0
    %1466 = vdwg.mxu0
    %v1468 = vsel %vm898, %v1156, 0
    %1470 = vmatprep.subr.bf16.mxu0 0
    %1471 = vmatpush1.bf16.msra.mxu0 %v1146
    %1472 = vmatprep.subr.bf16.mxu0 0
    %1473 = vmatpush1.bf16.msra.mxu0 0
    %1474 = vmatprep.subr.bf16.mxu0 0
    %1475 = vmatpush1.bf16.msra.mxu0 0
    %1476 = vmatprep.subr.bf16.mxu0 0
    %1477 = vmatpush1.bf16.msra.mxu0 0
    %1478 = vmatprep.subr.bf16.mxu0 0
    %1479 = vmatpush1.bf16.msra.mxu0 0
    %1480 = vmatprep.subr.bf16.mxu0 0
    %1481 = vmatpush1.bf16.msra.mxu0 0
    %1482 = vmatprep.subr.bf16.mxu0 0
    %1483 = vmatpush1.bf16.msra.mxu0 0
    %1484 = vmatprep.subr.bf16.mxu0 0
    %1485 = vmatpush1.bf16.msra.mxu0 0
    %1486 = vmatprep.subr.bf16.mxu0 0
    %1487 = vmatpush1.bf16.msra.mxu0 0
    %1488 = vmatprep.subr.bf16.mxu0 0
    %1489 = vmatpush1.bf16.msra.mxu0 0
    %1490 = vmatprep.subr.bf16.mxu0 0
    %1491 = vmatpush1.bf16.msra.mxu0 0
    %1492 = vmatprep.subr.bf16.mxu0 0
    %1493 = vmatpush1.bf16.msra.mxu0 0
    %1494 = vmatprep.subr.bf16.mxu0 0
    %1495 = vmatpush1.bf16.msra.mxu0 0
    %1496 = vmatprep.subr.bf16.mxu0 0
    %1497 = vmatpush1.bf16.msra.mxu0 0
    %1498 = vmatprep.subr.bf16.mxu0 0
    %1499 = vmatpush1.bf16.msra.mxu0 0
    %1500 = vmatprep.subr.bf16.mxu0 0
    %1501 = vmatpush1.bf16.msra.mxu0 0
    %1502 = vmatprep.mubr.bf16.mxu0 0
    %1503 = vmatmul.mubr.bf16.gmra.mrb[0].mxu0 %v1468
    %v1504 = vpop.f32.mrb[0].mxu0
    %v1505 = vadd.f32 0.0, %v1504
    %v1506 = vpop.f32.mrb[0].mxu0
    %v1507 = vpop.f32.mrb[0].mxu0
    %v1508 = vadd.f32 0.0, %v1507
    %v1509 = vpop.f32.mrb[0].mxu0
    %1510 = vdwg.mxu0
    %v1512 = vsel %vm898, %v1157, 0
    %1514 = vmatprep.subr.bf16.mxu0 0
    %1515 = vmatpush1.bf16.msra.mxu0 %v1147
    %1516 = vmatprep.subr.bf16.mxu0 0
    %1517 = vmatpush1.bf16.msra.mxu0 0
    %1518 = vmatprep.subr.bf16.mxu0 0
    %1519 = vmatpush1.bf16.msra.mxu0 0
    %1520 = vmatprep.subr.bf16.mxu0 0
    %1521 = vmatpush1.bf16.msra.mxu0 0
    %1522 = vmatprep.subr.bf16.mxu0 0
    %1523 = vmatpush1.bf16.msra.mxu0 0
    %1524 = vmatprep.subr.bf16.mxu0 0
    %1525 = vmatpush1.bf16.msra.mxu0 0
    %1526 = vmatprep.subr.bf16.mxu0 0
    %1527 = vmatpush1.bf16.msra.mxu0 0
    %1528 = vmatprep.subr.bf16.mxu0 0
    %1529 = vmatpush1.bf16.msra.mxu0 0
    %1530 = vmatprep.subr.bf16.mxu0 0
    %1531 = vmatpush1.bf16.msra.mxu0 0
    %1532 = vmatprep.subr.bf16.mxu0 0
    %1533 = vmatpush1.bf16.msra.mxu0 0
    %1534 = vmatprep.subr.bf16.mxu0 0
    %1535 = vmatpush1.bf16.msra.mxu0 0
    %1536 = vmatprep.subr.bf16.mxu0 0
    %1537 = vmatpush1.bf16.msra.mxu0 0
    %1538 = vmatprep.subr.bf16.mxu0 0
    %1539 = vmatpush1.bf16.msra.mxu0 0
    %1540 = vmatprep.subr.bf16.mxu0 0
    %1541 = vmatpush1.bf16.msra.mxu0 0
    %1542 = vmatprep.subr.bf16.mxu0 0
    %1543 = vmatpush1.bf16.msra.mxu0 0
    %1544 = vmatprep.subr.bf16.mxu0 0
    %1545 = vmatpush1.bf16.msra.mxu0 0
    %1546 = vmatprep.mubr.bf16.mxu0 0
    %1547 = vmatmul.mubr.bf16.gmra.mrb[0].mxu0 %v1512
    %v1548 = vpop.f32.mrb[0].mxu0
    %v1549 = vadd.f32 0.0, %v1548
    %v1550 = vpop.f32.mrb[0].mxu0
    %v1551 = vpop.f32.mrb[0].mxu0
    %v1552 = vadd.f32 0.0, %v1551
    %v1553 = vpop.f32.mrb[0].mxu0
    %1554 = vdwg.mxu0
    %v1556 = vsel %vm898, %v1158, 0
    %1558 = vmatprep.subr.bf16.mxu0 0
    %1559 = vmatpush1.bf16.msra.mxu0 %v1148
    %1560 = vmatprep.subr.bf16.mxu0 0
    %1561 = vmatpush1.bf16.msra.mxu0 0
    %1562 = vmatprep.subr.bf16.mxu0 0
    %1563 = vmatpush1.bf16.msra.mxu0 0
    %1564 = vmatprep.subr.bf16.mxu0 0
    %1565 = vmatpush1.bf16.msra.mxu0 0
    %1566 = vmatprep.subr.bf16.mxu0 0
    %1567 = vmatpush1.bf16.msra.mxu0 0
    %1568 = vmatprep.subr.bf16.mxu0 0
    %1569 = vmatpush1.bf16.msra.mxu0 0
    %1570 = vmatprep.subr.bf16.mxu0 0
    %1571 = vmatpush1.bf16.msra.mxu0 0
    %1572 = vmatprep.subr.bf16.mxu0 0
    %1573 = vmatpush1.bf16.msra.mxu0 0
    %1574 = vmatprep.subr.bf16.mxu0 0
    %1575 = vmatpush1.bf16.msra.mxu0 0
    %1576 = vmatprep.subr.bf16.mxu0 0
    %1577 = vmatpush1.bf16.msra.mxu0 0
    %1578 = vmatprep.subr.bf16.mxu0 0
    %1579 = vmatpush1.bf16.msra.mxu0 0
    %1580 = vmatprep.subr.bf16.mxu0 0
    %1581 = vmatpush1.bf16.msra.mxu0 0
    %1582 = vmatprep.subr.bf16.mxu0 0
    %1583 = vmatpush1.bf16.msra.mxu0 0
    %1584 = vmatprep.subr.bf16.mxu0 0
    %1585 = vmatpush1.bf16.msra.mxu0 0
    %1586 = vmatprep.subr.bf16.mxu0 0
    %1587 = vmatpush1.bf16.msra.mxu0 0
    %1588 = vmatprep.subr.bf16.mxu0 0
    %1589 = vmatpush1.bf16.msra.mxu0 0
    %1590 = vmatprep.mubr.bf16.mxu0 0
    %1591 = vmatmul.mubr.bf16.gmra.mrb[0].mxu0 %v1556
    %v1592 = vpop.f32.mrb[0].mxu0
    %v1593 = vadd.f32 0.0, %v1592
    %v1594 = vpop.f32.mrb[0].mxu0
    %v1595 = vpop.f32.mrb[0].mxu0
    %v1596 = vadd.f32 0.0, %v1595
    %v1597 = vpop.f32.mrb[0].mxu0
    %1598 = vdwg.mxu0
    %v1599 = vsel %vm161, %v1197, 0.0
    %v1600 = vsel %vm161, %v1241, 0.0
    %v1601 = vadd.f32 %v1599, %v1600
    %v1602 = vsel %vm161, %v1285, 0.0
    %v1603 = vadd.f32 %v1601, %v1602
    %v1604 = vsel %vm161, %v1329, 0.0
    %v1605 = vadd.f32 %v1603, %v1604
    %v1606 = vsel %vm161, %v1373, 0.0
    %v1607 = vadd.f32 %v1605, %v1606
    %v1608 = vsel %vm161, %v1417, 0.0
    %v1609 = vadd.f32 %v1607, %v1608
    %v1610 = vsel %vm161, %v1461, 0.0
    %v1611 = vadd.f32 %v1609, %v1610
    %v1612 = vsel %vm161, %v1505, 0.0
    %v1613 = vadd.f32 %v1611, %v1612
    %v1614 = vsel %vm161, %v1549, 0.0
    %v1615 = vadd.f32 %v1613, %v1614
    %v1616 = vsel %vm161, %v1593, 0.0
    %v1617 = vadd.f32 %v1615, %v1616
    %v1618 = vsel %vm161, %v1200, 0.0
    %v1619 = vsel %vm161, %v1244, 0.0
    %v1620 = vadd.f32 %v1618, %v1619
    %v1621 = vsel %vm161, %v1288, 0.0
    %v1622 = vadd.f32 %v1620, %v1621
    %v1623 = vsel %vm161, %v1332, 0.0
    %v1624 = vadd.f32 %v1622, %v1623
    %v1625 = vsel %vm161, %v1376, 0.0
    %v1626 = vadd.f32 %v1624, %v1625
    %v1627 = vsel %vm161, %v1420, 0.0
    %v1628 = vadd.f32 %v1626, %v1627
    %v1629 = vsel %vm161, %v1464, 0.0
    %v1630 = vadd.f32 %v1628, %v1629
    %v1631 = vsel %vm161, %v1508, 0.0
    %v1632 = vadd.f32 %v1630, %v1631
    %v1633 = vsel %vm161, %v1552, 0.0
    %v1634 = vadd.f32 %v1632, %v1633
    %v1635 = vsel %vm161, %v1596, 0.0
    %v1636 = vadd.f32 %v1634, %v1635
    %v1637 = vpack.c.bf16 %v1636, %v1617
    %v1638 = vld [vmem:[%s10] sm:$0xf]
    %v1639 = vld [vmem:[%s10 + $0x4] sm:$0xf]
    %v1640 = vld [vmem:[%s10 + $0x8] sm:$0xf]
    %v1641 = vld [vmem:[%s10 + $0xc] sm:$0xf]
    %v1642 = vld [vmem:[%s10 + $0x10] sm:$0xf]
    %v1643 = vld [vmem:[%s11] sm:$0x1]
    %v1645 = vlaneseq
    %v1646 = vshrl.u32 %v1645, 7
    %v1647 = vsub.s32 0, %v1646
    %v1648 = vrot.slane %v1643, %v1647
    %v1655 = vunpack.c.l.b16 %v1638
    %v1656 = vunpack.c.l.b16 %v1639
    %v1657 = vunpack.c.l.b16 %v1640
    %v1658 = vunpack.c.l.b16 %v1641
    %v1659 = vunpack.c.l.b16 %v1642
    %v1660 = vpack.c.b16 %v1656, %v1655
    %v1661 = vpack.c.b16 %v1658, %v1657
    %v1662 = vpack.c.b16 %v1659, %v1659
    %v1666 = vsel %vm161, %v1637, 0
    %v1669 = vsel %vm165, %v1662, 0
    %1671 = vmatprep.subr.bf16.mxu0 0
    %1672 = vmatpush1.bf16.msra.mxu0 %v1660
    %1673 = vmatprep.subr.bf16.mxu0 0
    %1674 = vmatpush1.bf16.msra.mxu0 %v1661
    %1675 = vmatprep.subr.bf16.mxu0 0
    %1676 = vmatpush1.bf16.msra.mxu0 %v1669
    %1677 = vmatprep.subr.bf16.mxu0 0
    %1678 = vmatpush1.bf16.msra.mxu0 0
    %1679 = vmatprep.subr.bf16.mxu0 0
    %1680 = vmatpush1.bf16.msra.mxu0 0
    %1681 = vmatprep.subr.bf16.mxu0 0
    %1682 = vmatpush1.bf16.msra.mxu0 0
    %1683 = vmatprep.subr.bf16.mxu0 0
    %1684 = vmatpush1.bf16.msra.mxu0 0
    %1685 = vmatprep.subr.bf16.mxu0 0
    %1686 = vmatpush1.bf16.msra.mxu0 0
    %1687 = vmatprep.subr.bf16.mxu0 0
    %1688 = vmatpush1.bf16.msra.mxu0 0
    %1689 = vmatprep.subr.bf16.mxu0 0
    %1690 = vmatpush1.bf16.msra.mxu0 0
    %1691 = vmatprep.subr.bf16.mxu0 0
    %1692 = vmatpush1.bf16.msra.mxu0 0
    %1693 = vmatprep.subr.bf16.mxu0 0
    %1694 = vmatpush1.bf16.msra.mxu0 0
    %1695 = vmatprep.subr.bf16.mxu0 0
    %1696 = vmatpush1.bf16.msra.mxu0 0
    %1697 = vmatprep.subr.bf16.mxu0 0
    %1698 = vmatpush1.bf16.msra.mxu0 0
    %1699 = vmatprep.subr.bf16.mxu0 0
    %1700 = vmatpush1.bf16.msra.mxu0 0
    %1701 = vmatprep.subr.bf16.mxu0 0
    %1702 = vmatpush1.bf16.msra.mxu0 0
    %1703 = vmatprep.mubr.bf16.mxu0 0
    %1704 = vmatmul.mubr.bf16.gmra.mrb[0].mxu0 %v1666
    %v1705 = vpop.f32.mrb[0].mxu0
    %v1706 = vadd.f32 %v1648, %v1705
    %v1707 = vpop.f32.mrb[0].mxu0
    %v1708 = vpop.f32.mrb[0].mxu0
    %v1709 = vadd.f32 %v1648, %v1708
    %v1710 = vpop.f32.mrb[0].mxu0
    %1711 = vdwg.mxu0
    %v1712 = vadd.f32 %v131, %v1706
    %v1713 = vadd.f32 %v132, %v1709
    %v1714 = vld [vmem:[%s12] sm:$0x1]
    %v1715 = vld [vmem:[%s13] sm:$0x1]
    %v1716 = vsel %vm161, %v1712, 0.0
    %1717 = vadd.xlane.f32.xlu0 %v1716
    %v1718 = vpop.xlane.xlu0 %1717
    %v1719 = vsel %vm161, %v1713, 0.0
    %1720 = vadd.xlane.f32.xlu0 %v1719
    %v1721 = vpop.xlane.xlu0 %1720
    %v1722 = vrcp.pop 40.0
    %v1723 = vmul.f32 %v1718, %v1722
    %v1724 = vmul.f32 %v1721, %v1722
    %v1725 = vsub.f32 %v1712, %v1723
    %v1726 = vsub.f32 %v1713, %v1724
    %v1727 = vmul.f32 %v1725, %v1725
    %v1728 = vmul.f32 %v1726, %v1726
    %v1729 = vsel %vm161, %v1727, 0.0
    %1730 = vadd.xlane.f32.xlu0 %v1729
    %v1731 = vpop.xlane.xlu0 %1730
    %v1732 = vsel %vm161, %v1728, 0.0
    %1733 = vadd.xlane.f32.xlu0 %v1732
    %v1734 = vpop.xlane.xlu0 %1733
    %v1735 = vmul.f32 %v1731, %v1722
    %v1736 = vmul.f32 %v1734, %v1722
    %v1737 = vadd.f32 %v1735, 1e-05
    %v1738 = vadd.f32 %v1736, 1e-05
    %v1739 = vrsqrt.pop %v1737
    %v1740 = vrsqrt.pop %v1738
    %v1741 = vmul.f32 %v1725, %v1739
    %v1742 = vmul.f32 %v1726, %v1740
    %v1744 = vlaneseq
    %v1745 = vshrl.u32 %v1744, 7
    %v1746 = vsub.s32 0, %v1745
    %v1747 = vrot.slane %v1714, %v1746
    %v1749 = vmul.f32 %v1741, %v1747
    %v1750 = vmul.f32 %v1742, %v1747
    %v1752 = vlaneseq
    %v1753 = vshrl.u32 %v1752, 7
    %v1754 = vsub.s32 0, %v1753
    %v1755 = vrot.slane %v1715, %v1754
    %v1757 = vadd.f32 %v1749, %v1755
    %v1758 = vadd.f32 %v1750, %v1755
    %v1759 = vpack.c.bf16 %v1758, %v1757
    %v1760 = vld [vmem:[%s14] sm:$0xf]
    %v1761 = vld [vmem:[%s14 + $0x4] sm:$0xf]
    %v1762 = vld [vmem:[%s14 + $0x8] sm:$0xf]
    %v1763 = vld [vmem:[%s14 + $0xc] sm:$0xf]
    %v1764 = vld [vmem:[%s14 + $0x10] sm:$0xf]
    %v1765 = vld [vmem:[%s15] sm:$0x1]
    %v1767 = vlaneseq
    %v1768 = vshrl.u32 %v1767, 7
    %v1769 = vsub.s32 0, %v1768
    %v1770 = vrot.slane %v1765, %v1769
    %v1777 = vunpack.c.l.b16 %v1760
    %v1778 = vunpack.c.l.b16 %v1761
    %v1779 = vunpack.c.l.b16 %v1762
    %v1780 = vunpack.c.l.b16 %v1763
    %v1781 = vunpack.c.l.b16 %v1764
    %v1782 = vpack.c.b16 %v1778, %v1777
    %v1783 = vpack.c.b16 %v1780, %v1779
    %v1784 = vpack.c.b16 %v1781, %v1781
    %v1788 = vsel %vm161, %v1759, 0
    %v1791 = vsel %vm165, %v1784, 0
    %1793 = vmatprep.subr.bf16.mxu0 0
    %1794 = vmatpush1.bf16.msra.mxu0 %v1782
    %1795 = vmatprep.subr.bf16.mxu0 0
    %1796 = vmatpush1.bf16.msra.mxu0 %v1783
    %1797 = vmatprep.subr.bf16.mxu0 0
    %1798 = vmatpush1.bf16.msra.mxu0 %v1791
    %1799 = vmatprep.subr.bf16.mxu0 0
    %1800 = vmatpush1.bf16.msra.mxu0 0
    %1801 = vmatprep.subr.bf16.mxu0 0
    %1802 = vmatpush1.bf16.msra.mxu0 0
    %1803 = vmatprep.subr.bf16.mxu0 0
    %1804 = vmatpush1.bf16.msra.mxu0 0
    %1805 = vmatprep.subr.bf16.mxu0 0
    %1806 = vmatpush1.bf16.msra.mxu0 0
    %1807 = vmatprep.subr.bf16.mxu0 0
    %1808 = vmatpush1.bf16.msra.mxu0 0
    %1809 = vmatprep.subr.bf16.mxu0 0
    %1810 = vmatpush1.bf16.msra.mxu0 0
    %1811 = vmatprep.subr.bf16.mxu0 0
    %1812 = vmatpush1.bf16.msra.mxu0 0
    %1813 = vmatprep.subr.bf16.mxu0 0
    %1814 = vmatpush1.bf16.msra.mxu0 0
    %1815 = vmatprep.subr.bf16.mxu0 0
    %1816 = vmatpush1.bf16.msra.mxu0 0
    %1817 = vmatprep.subr.bf16.mxu0 0
    %1818 = vmatpush1.bf16.msra.mxu0 0
    %1819 = vmatprep.subr.bf16.mxu0 0
    %1820 = vmatpush1.bf16.msra.mxu0 0
    %1821 = vmatprep.subr.bf16.mxu0 0
    %1822 = vmatpush1.bf16.msra.mxu0 0
    %1823 = vmatprep.subr.bf16.mxu0 0
    %1824 = vmatpush1.bf16.msra.mxu0 0
    %1825 = vmatprep.mubr.bf16.mxu0 0
    %1826 = vmatmul.mubr.bf16.gmra.mrb[0].mxu0 %v1788
    %v1827 = vpop.f32.mrb[0].mxu0
    %v1828 = vadd.f32 %v1770, %v1827
    %v1829 = vpop.f32.mrb[0].mxu0
    %v1830 = vpop.f32.mrb[0].mxu0
    %v1831 = vadd.f32 %v1770, %v1830
    %v1832 = vpop.f32.mrb[0].mxu0
    %1833 = vdwg.mxu0
    %v1834 = vmax.f32 %v1828, 0.0
    %v1835 = vmax.f32 %v1831, 0.0
    %v1836 = vpack.c.bf16 %v1835, %v1834
    %v1837 = vld [vmem:[%s16] sm:$0xf]
    %v1838 = vld [vmem:[%s16 + $0x4] sm:$0xf]
    %v1839 = vld [vmem:[%s16 + $0x8] sm:$0xf]
    %v1840 = vld [vmem:[%s16 + $0xc] sm:$0xf]
    %v1841 = vld [vmem:[%s16 + $0x10] sm:$0xf]
    %v1842 = vld [vmem:[%s16 + $0x14] sm:$0xf]
    %v1843 = vld [vmem:[%s16 + $0x18] sm:$0xf]
    %v1844 = vld [vmem:[%s16 + $0x1c] sm:$0xf]
    %v1845 = vld [vmem:[%s16 + $0x20] sm:$0xf]
    %v1846 = vld [vmem:[%s16 + $0x24] sm:$0xf]
    %v1847 = vld [vmem:[%s16 + $0x28] sm:$0xf]
    %v1848 = vld [vmem:[%s16 + $0x2c] sm:$0xf]
    %v1849 = vld [vmem:[%s16 + $0x30] sm:$0xf]
    %v1850 = vld [vmem:[%s16 + $0x34] sm:$0xf]
    %v1851 = vld [vmem:[%s16 + $0x38] sm:$0xf]
    %v1852 = vld [vmem:[%s16 + $0x3c] sm:$0xf]
    %v1853 = vld [vmem:[%s17] sm:$0x1]
    %v1855 = vlaneseq
    %v1856 = vshrl.u32 %v1855, 7
    %v1857 = vsub.s32 0, %v1856
    %v1858 = vrot.slane %v1853, %v1857
    %v1876 = vunpack.c.l.b16 %v1837
    %v1877 = vunpack.c.l.b16 %v1838
    %v1878 = vunpack.c.l.b16 %v1839
    %v1879 = vunpack.c.l.b16 %v1840
    %v1880 = vunpack.c.l.b16 %v1841
    %v1881 = vunpack.c.l.b16 %v1842
    %v1882 = vunpack.c.l.b16 %v1843
    %v1883 = vunpack.c.l.b16 %v1844
    %v1884 = vunpack.c.l.b16 %v1845
    %v1885 = vunpack.c.l.b16 %v1846
    %v1886 = vunpack.c.l.b16 %v1847
    %v1887 = vunpack.c.l.b16 %v1848
    %v1888 = vunpack.c.l.b16 %v1849
    %v1889 = vunpack.c.l.b16 %v1850
    %v1890 = vunpack.c.l.b16 %v1851
    %v1891 = vunpack.c.l.b16 %v1852
    %v1892 = vpack.c.b16 %v1877, %v1876
    %v1893 = vpack.c.b16 %v1879, %v1878
    %v1894 = vpack.c.b16 %v1881, %v1880
    %v1895 = vpack.c.b16 %v1883, %v1882
    %v1896 = vpack.c.b16 %v1885, %v1884
    %v1897 = vpack.c.b16 %v1887, %v1886
    %v1898 = vpack.c.b16 %v1889, %v1888
    %v1899 = vpack.c.b16 %v1891, %v1890
    %1908 = vmatprep.subr.bf16.mxu0 0
    %1909 = vmatpush1.bf16.msra.mxu0 %v1892
    %1910 = vmatprep.subr.bf16.mxu0 0
    %1911 = vmatpush1.bf16.msra.mxu0 %v1893
    %1912 = vmatprep.subr.bf16.mxu0 0
    %1913 = vmatpush1.bf16.msra.mxu0 %v1894
    %1914 = vmatprep.subr.bf16.mxu0 0
    %1915 = vmatpush1.bf16.msra.mxu0 %v1895
    %1916 = vmatprep.subr.bf16.mxu0 0
    %1917 = vmatpush1.bf16.msra.mxu0 %v1896
    %1918 = vmatprep.subr.bf16.mxu0 0
    %1919 = vmatpush1.bf16.msra.mxu0 %v1897
    %1920 = vmatprep.subr.bf16.mxu0 0
    %1921 = vmatpush1.bf16.msra.mxu0 %v1898
    %1922 = vmatprep.subr.bf16.mxu0 0
    %1923 = vmatpush1.bf16.msra.mxu0 %v1899
    %1924 = vmatprep.subr.bf16.mxu0 0
    %1925 = vmatpush1.bf16.msra.mxu0 0
    %1926 = vmatprep.subr.bf16.mxu0 0
    %1927 = vmatpush1.bf16.msra.mxu0 0
    %1928 = vmatprep.subr.bf16.mxu0 0
    %1929 = vmatpush1.bf16.msra.mxu0 0
    %1930 = vmatprep.subr.bf16.mxu0 0
    %1931 = vmatpush1.bf16.msra.mxu0 0
    %1932 = vmatprep.subr.bf16.mxu0 0
    %1933 = vmatpush1.bf16.msra.mxu0 0
    %1934 = vmatprep.subr.bf16.mxu0 0
    %1935 = vmatpush1.bf16.msra.mxu0 0
    %1936 = vmatprep.subr.bf16.mxu0 0
    %1937 = vmatpush1.bf16.msra.mxu0 0
    %1938 = vmatprep.subr.bf16.mxu0 0
    %1939 = vmatpush1.bf16.msra.mxu0 0
    %1940 = vmatprep.mubr.bf16.mxu0 0
    %1941 = vmatmul.mubr.bf16.gmra.mrb[0].mxu0 %v1836
    %v1942 = vpop.f32.mrb[0].mxu0
    %v1943 = vadd.f32 %v1858, %v1942
    %v1944 = vpop.f32.mrb[0].mxu0
    %v1945 = vpop.f32.mrb[0].mxu0
    %v1946 = vadd.f32 %v1858, %v1945
    %v1947 = vpop.f32.mrb[0].mxu0
    %1948 = vdwg.mxu0
    %v1949 = vadd.f32 %v1757, %v1943
    %v1950 = vadd.f32 %v1758, %v1946
    %v1951 = vld [vmem:[%s18] sm:$0x1]
    %v1952 = vld [vmem:[%s19] sm:$0x1]
    %v1953 = vsel %vm161, %v1949, 0.0
    %1954 = vadd.xlane.f32.xlu0 %v1953
    %v1955 = vpop.xlane.xlu0 %1954
    %v1956 = vsel %vm161, %v1950, 0.0
    %1957 = vadd.xlane.f32.xlu0 %v1956
    %v1958 = vpop.xlane.xlu0 %1957
    %v1959 = vmul.f32 %v1955, %v1722
    %v1960 = vmul.f32 %v1958, %v1722
    %v1961 = vsub.f32 %v1949, %v1959
    %v1962 = vsub.f32 %v1950, %v1960
    %v1963 = vmul.f32 %v1961, %v1961
    %v1964 = vmul.f32 %v1962, %v1962
    %v1965 = vsel %vm161, %v1963, 0.0
    %1966 = vadd.xlane.f32.xlu0 %v1965
    %v1967 = vpop.xlane.xlu0 %1966
    %v1968 = vsel %vm161, %v1964, 0.0
    %1969 = vadd.xlane.f32.xlu0 %v1968
    %v1970 = vpop.xlane.xlu0 %1969
    %v1971 = vmul.f32 %v1967, %v1722
    %v1972 = vmul.f32 %v1970, %v1722
    %v1973 = vadd.f32 %v1971, 1e-05
    %v1974 = vadd.f32 %v1972, 1e-05
    %v1975 = vrsqrt.pop %v1973
    %v1976 = vrsqrt.pop %v1974
    %v1977 = vmul.f32 %v1961, %v1975
    %v1978 = vmul.f32 %v1962, %v1976
    %v1980 = vlaneseq
    %v1981 = vshrl.u32 %v1980, 7
    %v1982 = vsub.s32 0, %v1981
    %v1983 = vrot.slane %v1951, %v1982
    %v1985 = vmul.f32 %v1977, %v1983
    %v1986 = vmul.f32 %v1978, %v1983
    %v1988 = vlaneseq
    %v1989 = vshrl.u32 %v1988, 7
    %v1990 = vsub.s32 0, %v1989
    %v1991 = vrot.slane %v1952, %v1990
    %v1993 = vadd.f32 %v1985, %v1991
    %v1994 = vadd.f32 %v1986, %v1991
    %v1995 = vld [vmem:[%s20] sm:$0x1]
    %v1997 = vlaneseq
    %v1998 = vshrl.u32 %v1997, 7
    %v1999 = vsub.s32 0, %v1998
    %v2000 = vrot.slane %v1995, %v1999
    %v2002 = vmul.f32 %v1993, %v2000
    %v2003 = vmul.f32 %v1994, %v2000
    %v2004 = vsel %vm161, %v2002, 0.0
    %2005 = vadd.xlane.f32.xlu0 %v2004
    %v2006 = vpop.xlane.xlu0 %2005
    %v2007 = vsel %vm161, %v2003, 0.0
    %2008 = vadd.xlane.f32.xlu0 %v2007
    %v2009 = vpop.xlane.xlu0 %2008
    %v2010 = vld [vmem:[#allocation2] sm:$0x1]
    %v2012 = vlaneseq
    %v2013 = vshrl.u32 %v2012, 7
    %v2014 = vsub.s32 0, %v2013
    %v2015 = vrot.slane %v2010, %v2014
    %2016 = vset.pattern.permute.xlu0 0
    %2017 = vperm.xlu0 %2016, %v2015
    %v2018 = vpop.permute.xlu0 %2017
    %v2020 = vadd.f32 %v2006, %v2018
    %v2021 = vadd.f32 %v2009, %v2018
    %v2024 = vlaneseq
    %v2025 = vand.u32 %v2024, 127
    %v2026 = vlaneseq
    %v2027 = vshrl.u32 %v2026, 7
    %v2028 = vsub.s32 %v2025, %v2027
    %v2029 = vrot.slane %v2020, %v2028
    %v2030 = vlaneseq
    %v2031 = vshrl.u32 %v2030, 7
    %v2032 = vsub.s32 %v2025, %v2031
    %v2033 = vrot.slane %v2021, %v2032
    %vm2034 = vcmask 1041409
    %v2035 = vsel %vm2034, %v2033, %v2029
    %vm2037 = vcmask 58368
    %2038 = vst.msk [vmem:[#allocation11] sm:$0x3] %vm2037, %v2035
    // Predicated region
    $region106: #{tpu_custom_call.1} parent=1 // pred_check
      _
    $region107: #{tpu_custom_call.1} parent=1 // pred_check_branch
      %2040 = sbr.rel (0) target = $region109
    $region108: #{tpu_custom_call.1} parent=1 // pred_region
      %s2042 = ssub.s32 32, 32
      %2043 = vsyncadd [#allocation5], %s2042
      %s2045 = sshll.u32 [#allocation11], 4
      %s2046 = int_to_ptr.vmem [resolvable:$true] %s2045
      %2048 = dma.vmem_to_hbm [thread:$0]  %s2046, 32, %s22, [#allocation5]
    $region109: #{tpu_custom_call.1} parent=1 // pred_fallthru
      _
    // Predicated region
    $region110: #{tpu_custom_call.1} parent=1 // pred_check
      _
    $region111: #{tpu_custom_call.1} parent=1 // pred_check_branch
      %2050 = sbr.rel (0) target = $region113
    $region112: #{tpu_custom_call.1} parent=1 // pred_region
      %2051 = dma.done [#allocation5], 32
    $region113: #{tpu_custom_call.1} parent=1 // pred_fallthru
      _
    %2052 = vsyncpa [#allocation4], 1
    %2053 = vsyncpa [#allocation7], 1
    %2054 = vsyncpa [#allocation10], 1
    %2055 = vsyncpa [#allocation5], 1

</llo_original>
